<compile_context>
chip_gen: v6e
topology: v6e:2x2x1
jax: 0.10.0
libtpu: 0.0.40
codegen_flags: <defaults>
</compile_context>

<pallas_src>
import numpy as np

import jax
import jax.numpy as jnp
from jax import lax
from jax.experimental import pallas as pl
from jax.experimental.pallas import tpu as pltpu


_PS = 128          # per-phase lane stride: even-ow columns at 0, odd-ow at 128
_NEG = -1e9        # padded fc2 bias (exp underflows to 0 in log_softmax)


# ----------------------------------------------------------------------------
# In-kernel helpers (traced inside the Pallas kernel; all ops tile-aligned)
# ----------------------------------------------------------------------------

def _banded_conv(act, band_ref, bias_ref, oh, tb):
    """'valid' conv as a sum over kernel rows of banded MXU matmuls.

    act:  (H_in * tb, L_in) bf16, rows ordered (h, b)
    band_ref: (K, L_in, 2*_PS) bf16 with the even/odd-OW pool split baked in
    returns (oh * tb, 2*_PS) f32, rows ordered (oh, b),
            lanes = phase*_PS + ow2*Cout + co
    """
    k = band_ref.shape[0]
    out = None
    for kh in range(k):
        lhs = act[kh * tb:(kh + oh) * tb, :]          # 8-aligned sublane slice
        term = jnp.dot(lhs, band_ref[kh], preferred_element_type=jnp.float32)
        out = term if out is None else out + term
    return out + bias_ref[...]                        # f32 bias fused


def _pool2x2_relu(y, oh, tb):
    """relu(max_pool2d(., 2)) on a (oh*tb, 2*_PS) slab (rows=(oh,b)).

    H-pool: 8-aligned sublane regroup + elementwise max.
    W-pool: VPU max of the two 128-lane phase groups (no matmul).
    """
    lanes = y.shape[1]
    half = lanes // 2
    r = y.reshape(oh // 2, 2, tb, lanes)
    r = jnp.maximum(r[:, 0], r[:, 1]).reshape((oh // 2) * tb, lanes)
    p = jnp.maximum(r[:, :half], r[:, half:])         # even-ow vs odd-ow
    return jnp.maximum(p, 0.0)                        # ReLU fused


# ----------------------------------------------------------------------------
# Fused forward kernel (one batch tile per grid step; everything in VMEM)
# ----------------------------------------------------------------------------

def _simple_cnn_kernel(x_ref, w1b_ref, b1_ref, w2b_ref, b2_ref,
                       wd_ref, bd_ref, wf_ref, bf_ref, o_ref):
    f32 = jnp.float32
    bf16 = jnp.bfloat16
    tb = x_ref.shape[2]                               # batch tile (sublanes)
    H, W = x_ref.shape[1], x_ref.shape[3]

    # Input tile (1, 28, tb, 28) -> rows (h, b), lanes = w (tile-exact merge).
    x = x_ref[...].reshape(H * tb, W).astype(bf16)

    # conv1: 1 -> 10, k=5  ->  (24*tb, 256) f32, phases split at lane 128
    h1 = _banded_conv(x, w1b_ref, b1_ref, oh=24, tb=tb)
    # relu(max_pool2d(., 2))  ->  (12*tb, 128); lanes [0,120) valid, rest 0
    p1 = _pool2x2_relu(h1, oh=24, tb=tb).astype(bf16)

    # conv2: 10 -> 20, k=5 (conv2_drop identity in eval mode) -> (8*tb, 256)
    h2 = _banded_conv(p1, w2b_ref, b2_ref, oh=8, tb=tb)
    p2 = _pool2x2_relu(h2, oh=8, tb=tb).astype(bf16)  # (4*tb, 128)

    # head: dense(320 -> hidden) -> (dense_drop identity) -> fc2 -> log_softmax
    hidden = wd_ref.shape[2]
    h = jnp.zeros((tb, hidden), f32)
    for oh in range(wd_ref.shape[0]):                 # 4 pooled rows
        h = h + jnp.dot(p2[oh * tb:(oh + 1) * tb, :], wd_ref[oh],
                        preferred_element_type=f32)
    h = (h + bd_ref[...]).astype(bf16)
    # fc2 is pre-padded to 128 lanes; pad bias = -1e9 so softmax ignores them.
    logits = jnp.dot(h, wf_ref[...], preferred_element_type=f32) + bf_ref[...]

    m = jnp.max(logits, axis=-1, keepdims=True)
    z = logits - m
    logp = z - jnp.log(jnp.sum(jnp.exp(z), axis=-1, keepdims=True))

    o_ref[...] = logp                                 # single unmasked 128-lane store


# ----------------------------------------------------------------------------
# One-time weight re-layout (PyTorch layout -> kernel-resident form)
# ----------------------------------------------------------------------------

def _conv_band_pooled(w, w_in, in_lanes=None):
    """Banded conv weights with the even/odd-OW W-pool split baked into columns.

    band[kh, wi*Cin + ci, phase*_PS + ow2*Cout + co] = w[co, ci, kh, kw]
    with wi = (2*ow2 + phase) + kw.  Rows beyond w_in*Cin (lane padding of the
    previous stage's output) stay zero.
    """
    w = np.asarray(w, np.float32)
    cout, cin, k, _ = w.shape
    ow = w_in - k + 1
    ow2 = ow // 2
    rows_total = in_lanes if in_lanes is not None else w_in * cin
    band = np.zeros((k, rows_total, 2 * _PS), np.float32)
    qq, ci, co = np.meshgrid(np.arange(ow2), np.arange(cin), np.arange(cout),
                             indexing="ij")
    for kh in range(k):
        for kw in range(k):
            for phase in (0, 1):
                rows = ((2 * qq + phase + kw) * cin + ci).ravel()
                cols = (phase * _PS + qq * cout + co).ravel()
                band[kh, rows, cols] = w[co.ravel(), ci.ravel(), kh, kw]
    return band


def _bias_pooled(b, ow2):
    """Conv bias broadcast into both 128-lane phase groups; pad lanes = 0."""
    b = np.asarray(b, np.float32)
    cout = b.shape[0]
    out = np.zeros((1, 2 * _PS), np.float32)
    for phase in (0, 1):
        out[0, phase * _PS: phase * _PS + ow2 * cout] = np.tile(b, ow2)
    return out


def prepare_params(params):
    """Re-layout PyTorch-layout weights into the kernel's resident (bf16) form."""
    bf16 = jnp.bfloat16
    hidden = params["dense_w"].shape[1]

    w1b = _conv_band_pooled(params["conv1_w"], w_in=28)           # (5, 28, 256)
    w2b = _conv_band_pooled(params["conv2_w"], w_in=12, in_lanes=_PS)  # (5,128,256)
    b1 = _bias_pooled(params["conv1_b"], ow2=12)
    b2 = _bias_pooled(params["conv2_b"], ow2=4)

    # dense expects PyTorch's NCHW flatten index c*16 + oh*4 + ow; the kernel
    # holds p2 rows=(oh,b), lanes=(ow*20 + c, zero-padded to 128).
    dw = np.asarray(params["dense_w"], np.float32)                # (320, hidden)
    wd = np.zeros((4, _PS, hidden), np.float32)
    for oh in range(4):
        for ow in range(4):
            for c in range(20):
                wd[oh, ow * 20 + c, :] = dw[c * 16 + oh * 4 + ow, :]

    wf = np.zeros((hidden, 128), np.float32)
    wf[:, :10] = np.asarray(params["fc2_w"], np.float32)
    bfv = np.full((1, 128), _NEG, np.float32)
    bfv[0, :10] = np.asarray(params["fc2_b"], np.float32)

    return {
        "w1b": jnp.asarray(w1b, bf16), "b1": jnp.asarray(b1),
        "w2b": jnp.asarray(w2b, bf16), "b2": jnp.asarray(b2),
        "wd": jnp.asarray(wd, bf16),
        "bd": jnp.asarray(params["dense_b"], jnp.float32).reshape(1, hidden),
        "wf": jnp.asarray(wf, bf16), "bf": jnp.asarray(bfv),
    }


# ----------------------------------------------------------------------------
# Forward pass wrapper
# ----------------------------------------------------------------------------

def _round_up(n, m):
    return ((n + m - 1) // m) * m


def _vmem_budget_bytes(tb, hidden):
    """Explicit scoped-VMEM request sized from the real per-tile intermediates."""
    per_elem = (2 * 28 * 28 * 4          # input tile (f32, double-buffered)
                + 2 * 24 * 256 * 4       # conv1 f32 accumulator + live term
                + 12 * 256 * 4           # H-pool regroup (conv1)
                + 12 * 128 * (4 + 2)     # p1 f32 + bf16 cast
                + 2 * 8 * 256 * 4        # conv2 f32 accumulator + live term
                + 4 * 128 * (4 + 2)      # p2 f32 + bf16 cast
                + 4 * 128 * 4            # head temporaries / logits
                + 2 * 128 * 4)           # output (f32, double-buffered)
    weights = 2 * 2 * (5 * 28 * 256 + 5 * 128 * 256
                       + 4 * 128 * hidden + hidden * 128 + 4 * 256)
    need = per_elem * tb + weights + (4 << 20)        # slack for compiler scratch
    # >= 32 MiB (safe default everywhere), <= 64 MiB (v7x physical ceiling).
    return int(min(max(need, 32 << 20), 64 << 20))


def simple_cnn_forward(kparams, x, *, batch_tile=64):
    """Fused forward. x: (B, 1, 28, 28) float32 NCHW. Returns (B, 10) log-probs.

    batch_tile (multiple of 8) is the per-generation tuning knob: 64 fits the
    default 32 MiB scoped VMEM everywhere; up to ~128-256 is fine on v5e/v6e
    and ~128 on v7x (64 MiB physical) with the explicit vmem_limit below.
    """
    assert batch_tile % 8 == 0
    B = x.shape[0]
    assert x.shape[1:] == (1, 28, 28), x.shape
    n_cls = 10
    hidden = kparams["wd"].shape[2]

    # Tile size: multiple of 8, capped by batch_tile, and chosen so that large
    # batches produce >= 2 grid steps (v7x dual-TensorCore sharding).
    tb = int(min(batch_tile, max(8, _round_up((B + 1) // 2, 8))))
    n_tiles = int(pl.cdiv(B, tb))
    b_pad = n_tiles * tb

    # Boundary-only re-layout: NCHW -> pre-blocked (n_tiles, H, tb, W) so each
    # grid step's input DMA is one contiguous transfer.
    xb = x[:, 0, :, :]
    if b_pad != B:
        xb = jnp.pad(xb, ((0, b_pad - B), (0, 0), (0, 0)))
    xb = xb.reshape(n_tiles, tb, 28, 28).transpose(0, 2, 1, 3)

    def resident(a):                                  # weights stay in VMEM
        return pl.BlockSpec(a.shape, lambda i, _n=a.ndim: (0,) * _n)

    weights = (kparams["w1b"], kparams["b1"], kparams["w2b"], kparams["b2"],
               kparams["wd"], kparams["bd"], kparams["wf"], kparams["bf"])

    out = pl.pallas_call(
        _simple_cnn_kernel,
        out_shape=jax.ShapeDtypeStruct((b_pad, 128), jnp.float32),
        grid=(n_tiles,),
        in_specs=[pl.BlockSpec((1, 28, tb, 28), lambda i: (i, 0, 0, 0))]
                 + [resident(w) for w in weights],
        out_specs=pl.BlockSpec((tb, 128), lambda i: (i, 0)),
        compiler_params=pltpu.CompilerParams(
            dimension_semantics=("parallel",),        # shard tiles across TCs
            vmem_limit_bytes=_vmem_budget_bytes(tb, hidden),
        ),
    )(xb, *weights)

    return out[:B, :n_cls]


# ----------------------------------------------------------------------------
# Parameter init (PyTorch layout) + pure-JAX reference for validation
# ----------------------------------------------------------------------------

def init_params(key, hidden_neurons):
    def uniform(k, shape, fan_in):
        bound = 1.0 / jnp.sqrt(jnp.float32(fan_in))
        return jax.random.uniform(k, shape, jnp.float32, -bound, bound)

    ks = jax.random.split(key, 8)
    return {
        "conv1_w": uniform(ks[0], (10, 1, 5, 5), 1 * 5 * 5),
        "conv1_b": uniform(ks[1], (10,), 1 * 5 * 5),
        "conv2_w": uniform(ks[2], (20, 10, 5, 5), 10 * 5 * 5),
        "conv2_b": uniform(ks[3], (20,), 10 * 5 * 5),
        "dense_w": uniform(ks[4], (320, hidden_neurons), 320),  # stored (in, out)
        "dense_b": uniform(ks[5], (hidden_neurons,), 320),
        "fc2_w": uniform(ks[6], (hidden_neurons, 10), hidden_neurons),
        "fc2_b": uniform(ks[7], (10,), hidden_neurons),
    }


def _ref_pool_relu_nchw(y):
    b, c, h, w = y.shape
    y = y.reshape(b, c, h // 2, 2, w // 2, 2).max(axis=(3, 5))
    return jnp.maximum(y, 0.0)


def reference_forward(params, x):
    """Plain-JAX (XLA) reference mirroring the PyTorch module in eval mode."""
    hi = lax.Precision.HIGHEST
    y = lax.conv_general_dilated(x, params["conv1_w"], (1, 1), "VALID",
                                 dimension_numbers=("NCHW", "OIHW", "NCHW"),
                                 precision=hi)
    y = _ref_pool_relu_nchw(y + params["conv1_b"][None, :, None, None])
    y = lax.conv_general_dilated(y, params["conv2_w"], (1, 1), "VALID",
                                 dimension_numbers=("NCHW", "OIHW", "NCHW"),
                                 precision=hi)
    y = _ref_pool_relu_nchw(y + params["conv2_b"][None, :, None, None])
    y = y.reshape(-1, 320)
    y = jnp.dot(y, params["dense_w"], precision=hi) + params["dense_b"]
    y = jnp.dot(y, params["fc2_w"], precision=hi) + params["fc2_b"]
    return jax.nn.log_softmax(y, axis=-1)


if __name__ == "__main__":
    key = jax.random.PRNGKey(0)
    k_param, k_x = jax.random.split(key)

    hidden_neurons = 32
    params = init_params(k_param, hidden_neurons)
    kparams = prepare_params(params)          # one-time weight re-layout
    fwd = jax.jit(simple_cnn_forward, static_argnames=("batch_tile",))

    def check(batch):
        kb = jax.random.fold_in(k_x, batch)
        x = jax.random.normal(kb, (batch, 1, 28, 28), dtype=jnp.float32)
        out = jax.block_until_ready(fwd(kparams, x))
        assert out.shape == (batch, 10), out.shape
        # log_softmax rows must exp-sum to 1
        assert bool(jnp.allclose(jnp.sum(jnp.exp(out), axis=-1), 1.0, atol=1e-4))
        # numerics must match a plain-JAX HIGHEST-precision reference
        ref = reference_forward(params, x)
        assert bool(jnp.allclose(out, ref, atol=5e-2, rtol=5e-2)), (
            batch, float(jnp.max(jnp.abs(out - ref))))

    check(2)      # 1x28x28 input, tiny batch (flatten to 320 = 20 * 4 * 4)
    check(48)     # exercises the multi-tile grid / padding path
    print("KERNEL_OK")
</pallas_src>

<mosaic_0001>
module attributes {stable_mosaic.version = 11 : i64} {
  func.func @_simple_cnn_kernel(%arg0: i32, %arg1: memref<1x28x8x28xf32, #tpu.memory_space<vmem>>, %arg2: memref<5x28x256xbf16, #tpu.memory_space<vmem>>, %arg3: memref<1x256xf32, #tpu.memory_space<vmem>>, %arg4: memref<5x128x256xbf16, #tpu.memory_space<vmem>>, %arg5: memref<1x256xf32, #tpu.memory_space<vmem>>, %arg6: memref<4x128x32xbf16, #tpu.memory_space<vmem>>, %arg7: memref<1x32xf32, #tpu.memory_space<vmem>>, %arg8: memref<32x128xbf16, #tpu.memory_space<vmem>>, %arg9: memref<1x128xf32, #tpu.memory_space<vmem>>, %arg10: memref<8x128xf32, #tpu.memory_space<vmem>>) attributes {dimension_semantics = [#tpu.dimension_semantics<parallel>], iteration_bounds = array<i64: 1>, scalar_prefetch = 0 : i64, scratch_operands = 0 : i64, tpu.core_type = #tpu.core_type<tc>, window_params = [{transform_indices = @transform_0, window_bounds = array<i64: 1, 28, 8, 28>}, {pipeline_mode = #tpu.pipeline_mode<synchronous>, transform_indices = @transform_1, window_bounds = array<i64: 5, 28, 256>}, {pipeline_mode = #tpu.pipeline_mode<synchronous>, transform_indices = @transform_2, window_bounds = array<i64: 1, 256>}, {pipeline_mode = #tpu.pipeline_mode<synchronous>, transform_indices = @transform_3, window_bounds = array<i64: 5, 128, 256>}, {pipeline_mode = #tpu.pipeline_mode<synchronous>, transform_indices = @transform_4, window_bounds = array<i64: 1, 256>}, {pipeline_mode = #tpu.pipeline_mode<synchronous>, transform_indices = @transform_5, window_bounds = array<i64: 4, 128, 32>}, {pipeline_mode = #tpu.pipeline_mode<synchronous>, transform_indices = @transform_6, window_bounds = array<i64: 1, 32>}, {pipeline_mode = #tpu.pipeline_mode<synchronous>, transform_indices = @transform_7, window_bounds = array<i64: 32, 128>}, {pipeline_mode = #tpu.pipeline_mode<synchronous>, transform_indices = @transform_8, window_bounds = array<i64: 1, 128>}, {transform_indices = @transform_9, window_bounds = array<i64: 8, 128>}]} {
    %c0 = arith.constant 0 : index
    %c0_0 = arith.constant 0 : index
    %c0_1 = arith.constant 0 : index
    %c0_2 = arith.constant 0 : index
    %0 = vector.load %arg1[%c0, %c0_0, %c0_1, %c0_2] : memref<1x28x8x28xf32, #tpu.memory_space<vmem>>, vector<1x28x8x28xf32>
    %1 = vector.shape_cast %0 : vector<1x28x8x28xf32> to vector<224x28xf32>
    %2 = arith.truncf %1 : vector<224x28xf32> to vector<224x28xbf16>
    %3 = vector.extract_strided_slice %2 {offsets = [0, 0], sizes = [192, 28], strides = [1, 1]} : vector<224x28xbf16> to vector<192x28xbf16>
    %c0_3 = arith.constant 0 : index
    %c0_4 = arith.constant 0 : index
    %c0_5 = arith.constant 0 : index
    %4 = vector.load %arg2[%c0_3, %c0_4, %c0_5] : memref<5x28x256xbf16, #tpu.memory_space<vmem>>, vector<1x28x256xbf16>
    %5 = vector.shape_cast %4 : vector<1x28x256xbf16> to vector<28x256xbf16>
    %cst = arith.constant dense<0.000000e+00> : vector<192x256xf32>
    %6 = tpu.matmul %3, %5, %cst {dimension_numbers = #tpu.dot_dimension_numbers<[1], [0], [0], [1], [0, 0, 1, 1], [], []>} : vector<192x28xbf16>, vector<28x256xbf16>, vector<192x256xf32> -> vector<192x256xf32>
    %7 = vector.extract_strided_slice %2 {offsets = [8, 0], sizes = [192, 28], strides = [1, 1]} : vector<224x28xbf16> to vector<192x28xbf16>
    %c1 = arith.constant 1 : index
    %c0_6 = arith.constant 0 : index
    %c0_7 = arith.constant 0 : index
    %8 = vector.load %arg2[%c1, %c0_6, %c0_7] : memref<5x28x256xbf16, #tpu.memory_space<vmem>>, vector<1x28x256xbf16>
    %9 = vector.shape_cast %8 : vector<1x28x256xbf16> to vector<28x256xbf16>
    %cst_8 = arith.constant dense<0.000000e+00> : vector<192x256xf32>
    %10 = tpu.matmul %7, %9, %cst_8 {dimension_numbers = #tpu.dot_dimension_numbers<[1], [0], [0], [1], [0, 0, 1, 1], [], []>} : vector<192x28xbf16>, vector<28x256xbf16>, vector<192x256xf32> -> vector<192x256xf32>
    %11 = arith.addf %6, %10 : vector<192x256xf32>
    %12 = vector.extract_strided_slice %2 {offsets = [16, 0], sizes = [192, 28], strides = [1, 1]} : vector<224x28xbf16> to vector<192x28xbf16>
    %c2 = arith.constant 2 : index
    %c0_9 = arith.constant 0 : index
    %c0_10 = arith.constant 0 : index
    %13 = vector.load %arg2[%c2, %c0_9, %c0_10] : memref<5x28x256xbf16, #tpu.memory_space<vmem>>, vector<1x28x256xbf16>
    %14 = vector.shape_cast %13 : vector<1x28x256xbf16> to vector<28x256xbf16>
    %cst_11 = arith.constant dense<0.000000e+00> : vector<192x256xf32>
    %15 = tpu.matmul %12, %14, %cst_11 {dimension_numbers = #tpu.dot_dimension_numbers<[1], [0], [0], [1], [0, 0, 1, 1], [], []>} : vector<192x28xbf16>, vector<28x256xbf16>, vector<192x256xf32> -> vector<192x256xf32>
    %16 = arith.addf %11, %15 : vector<192x256xf32>
    %17 = vector.extract_strided_slice %2 {offsets = [24, 0], sizes = [192, 28], strides = [1, 1]} : vector<224x28xbf16> to vector<192x28xbf16>
    %c3 = arith.constant 3 : index
    %c0_12 = arith.constant 0 : index
    %c0_13 = arith.constant 0 : index
    %18 = vector.load %arg2[%c3, %c0_12, %c0_13] : memref<5x28x256xbf16, #tpu.memory_space<vmem>>, vector<1x28x256xbf16>
    %19 = vector.shape_cast %18 : vector<1x28x256xbf16> to vector<28x256xbf16>
    %cst_14 = arith.constant dense<0.000000e+00> : vector<192x256xf32>
    %20 = tpu.matmul %17, %19, %cst_14 {dimension_numbers = #tpu.dot_dimension_numbers<[1], [0], [0], [1], [0, 0, 1, 1], [], []>} : vector<192x28xbf16>, vector<28x256xbf16>, vector<192x256xf32> -> vector<192x256xf32>
    %21 = arith.addf %16, %20 : vector<192x256xf32>
    %22 = vector.extract_strided_slice %2 {offsets = [32, 0], sizes = [192, 28], strides = [1, 1]} : vector<224x28xbf16> to vector<192x28xbf16>
    %c4 = arith.constant 4 : index
    %c0_15 = arith.constant 0 : index
    %c0_16 = arith.constant 0 : index
    %23 = vector.load %arg2[%c4, %c0_15, %c0_16] : memref<5x28x256xbf16, #tpu.memory_space<vmem>>, vector<1x28x256xbf16>
    %24 = vector.shape_cast %23 : vector<1x28x256xbf16> to vector<28x256xbf16>
    %cst_17 = arith.constant dense<0.000000e+00> : vector<192x256xf32>
    %25 = tpu.matmul %22, %24, %cst_17 {dimension_numbers = #tpu.dot_dimension_numbers<[1], [0], [0], [1], [0, 0, 1, 1], [], []>} : vector<192x28xbf16>, vector<28x256xbf16>, vector<192x256xf32> -> vector<192x256xf32>
    %26 = arith.addf %21, %25 : vector<192x256xf32>
    %c0_18 = arith.constant 0 : index
    %c0_19 = arith.constant 0 : index
    %27 = vector.load %arg3[%c0_18, %c0_19] : memref<1x256xf32, #tpu.memory_space<vmem>>, vector<1x256xf32>
    %28 = vector.broadcast %27 : vector<1x256xf32> to vector<192x256xf32>
    %29 = arith.addf %26, %28 : vector<192x256xf32>
    %30 = vector.shape_cast %29 : vector<192x256xf32> to vector<12x2x8x256xf32>
    %31 = vector.extract_strided_slice %30 {offsets = [0, 0, 0, 0], sizes = [12, 1, 8, 256], strides = [1, 1, 1, 1]} : vector<12x2x8x256xf32> to vector<12x1x8x256xf32>
    %32 = vector.shape_cast %31 : vector<12x1x8x256xf32> to vector<12x8x256xf32>
    %33 = vector.extract_strided_slice %30 {offsets = [0, 1, 0, 0], sizes = [12, 1, 8, 256], strides = [1, 1, 1, 1]} : vector<12x2x8x256xf32> to vector<12x1x8x256xf32>
    %34 = vector.shape_cast %33 : vector<12x1x8x256xf32> to vector<12x8x256xf32>
    %35 = arith.maximumf %32, %34 : vector<12x8x256xf32>
    %36 = vector.shape_cast %35 : vector<12x8x256xf32> to vector<96x256xf32>
    %37 = vector.extract_strided_slice %36 {offsets = [0, 0], sizes = [96, 128], strides = [1, 1]} : vector<96x256xf32> to vector<96x128xf32>
    %38 = vector.extract_strided_slice %36 {offsets = [0, 128], sizes = [96, 128], strides = [1, 1]} : vector<96x256xf32> to vector<96x128xf32>
    %39 = arith.maximumf %37, %38 : vector<96x128xf32>
    %cst_20 = arith.constant 0.000000e+00 : f32
    %40 = vector.broadcast %cst_20 : f32 to vector<96x128xf32>
    %41 = arith.maximumf %39, %40 : vector<96x128xf32>
    %42 = arith.truncf %41 : vector<96x128xf32> to vector<96x128xbf16>
    %43 = vector.extract_strided_slice %42 {offsets = [0, 0], sizes = [64, 128], strides = [1, 1]} : vector<96x128xbf16> to vector<64x128xbf16>
    %c0_21 = arith.constant 0 : index
    %c0_22 = arith.constant 0 : index
    %c0_23 = arith.constant 0 : index
    %44 = vector.load %arg4[%c0_21, %c0_22, %c0_23] : memref<5x128x256xbf16, #tpu.memory_space<vmem>>, vector<1x128x256xbf16>
    %45 = vector.shape_cast %44 : vector<1x128x256xbf16> to vector<128x256xbf16>
    %cst_24 = arith.constant dense<0.000000e+00> : vector<64x256xf32>
    %46 = tpu.matmul %43, %45, %cst_24 {dimension_numbers = #tpu.dot_dimension_numbers<[1], [0], [0], [1], [0, 0, 1, 1], [], []>} : vector<64x128xbf16>, vector<128x256xbf16>, vector<64x256xf32> -> vector<64x256xf32>
    %47 = vector.extract_strided_slice %42 {offsets = [8, 0], sizes = [64, 128], strides = [1, 1]} : vector<96x128xbf16> to vector<64x128xbf16>
    %c1_25 = arith.constant 1 : index
    %c0_26 = arith.constant 0 : index
    %c0_27 = arith.constant 0 : index
    %48 = vector.load %arg4[%c1_25, %c0_26, %c0_27] : memref<5x128x256xbf16, #tpu.memory_space<vmem>>, vector<1x128x256xbf16>
    %49 = vector.shape_cast %48 : vector<1x128x256xbf16> to vector<128x256xbf16>
    %cst_28 = arith.constant dense<0.000000e+00> : vector<64x256xf32>
    %50 = tpu.matmul %47, %49, %cst_28 {dimension_numbers = #tpu.dot_dimension_numbers<[1], [0], [0], [1], [0, 0, 1, 1], [], []>} : vector<64x128xbf16>, vector<128x256xbf16>, vector<64x256xf32> -> vector<64x256xf32>
    %51 = arith.addf %46, %50 : vector<64x256xf32>
    %52 = vector.extract_strided_slice %42 {offsets = [16, 0], sizes = [64, 128], strides = [1, 1]} : vector<96x128xbf16> to vector<64x128xbf16>
    %c2_29 = arith.constant 2 : index
    %c0_30 = arith.constant 0 : index
    %c0_31 = arith.constant 0 : index
    %53 = vector.load %arg4[%c2_29, %c0_30, %c0_31] : memref<5x128x256xbf16, #tpu.memory_space<vmem>>, vector<1x128x256xbf16>
    %54 = vector.shape_cast %53 : vector<1x128x256xbf16> to vector<128x256xbf16>
    %cst_32 = arith.constant dense<0.000000e+00> : vector<64x256xf32>
    %55 = tpu.matmul %52, %54, %cst_32 {dimension_numbers = #tpu.dot_dimension_numbers<[1], [0], [0], [1], [0, 0, 1, 1], [], []>} : vector<64x128xbf16>, vector<128x256xbf16>, vector<64x256xf32> -> vector<64x256xf32>
    %56 = arith.addf %51, %55 : vector<64x256xf32>
    %57 = vector.extract_strided_slice %42 {offsets = [24, 0], sizes = [64, 128], strides = [1, 1]} : vector<96x128xbf16> to vector<64x128xbf16>
    %c3_33 = arith.constant 3 : index
    %c0_34 = arith.constant 0 : index
    %c0_35 = arith.constant 0 : index
    %58 = vector.load %arg4[%c3_33, %c0_34, %c0_35] : memref<5x128x256xbf16, #tpu.memory_space<vmem>>, vector<1x128x256xbf16>
    %59 = vector.shape_cast %58 : vector<1x128x256xbf16> to vector<128x256xbf16>
    %cst_36 = arith.constant dense<0.000000e+00> : vector<64x256xf32>
    %60 = tpu.matmul %57, %59, %cst_36 {dimension_numbers = #tpu.dot_dimension_numbers<[1], [0], [0], [1], [0, 0, 1, 1], [], []>} : vector<64x128xbf16>, vector<128x256xbf16>, vector<64x256xf32> -> vector<64x256xf32>
    %61 = arith.addf %56, %60 : vector<64x256xf32>
    %62 = vector.extract_strided_slice %42 {offsets = [32, 0], sizes = [64, 128], strides = [1, 1]} : vector<96x128xbf16> to vector<64x128xbf16>
    %c4_37 = arith.constant 4 : index
    %c0_38 = arith.constant 0 : index
    %c0_39 = arith.constant 0 : index
    %63 = vector.load %arg4[%c4_37, %c0_38, %c0_39] : memref<5x128x256xbf16, #tpu.memory_space<vmem>>, vector<1x128x256xbf16>
    %64 = vector.shape_cast %63 : vector<1x128x256xbf16> to vector<128x256xbf16>
    %cst_40 = arith.constant dense<0.000000e+00> : vector<64x256xf32>
    %65 = tpu.matmul %62, %64, %cst_40 {dimension_numbers = #tpu.dot_dimension_numbers<[1], [0], [0], [1], [0, 0, 1, 1], [], []>} : vector<64x128xbf16>, vector<128x256xbf16>, vector<64x256xf32> -> vector<64x256xf32>
    %66 = arith.addf %61, %65 : vector<64x256xf32>
    %c0_41 = arith.constant 0 : index
    %c0_42 = arith.constant 0 : index
    %67 = vector.load %arg5[%c0_41, %c0_42] : memref<1x256xf32, #tpu.memory_space<vmem>>, vector<1x256xf32>
    %68 = vector.broadcast %67 : vector<1x256xf32> to vector<64x256xf32>
    %69 = arith.addf %66, %68 : vector<64x256xf32>
    %70 = vector.shape_cast %69 : vector<64x256xf32> to vector<4x2x8x256xf32>
    %71 = vector.extract_strided_slice %70 {offsets = [0, 0, 0, 0], sizes = [4, 1, 8, 256], strides = [1, 1, 1, 1]} : vector<4x2x8x256xf32> to vector<4x1x8x256xf32>
    %72 = vector.shape_cast %71 : vector<4x1x8x256xf32> to vector<4x8x256xf32>
    %73 = vector.extract_strided_slice %70 {offsets = [0, 1, 0, 0], sizes = [4, 1, 8, 256], strides = [1, 1, 1, 1]} : vector<4x2x8x256xf32> to vector<4x1x8x256xf32>
    %74 = vector.shape_cast %73 : vector<4x1x8x256xf32> to vector<4x8x256xf32>
    %75 = arith.maximumf %72, %74 : vector<4x8x256xf32>
    %76 = vector.shape_cast %75 : vector<4x8x256xf32> to vector<32x256xf32>
    %77 = vector.extract_strided_slice %76 {offsets = [0, 0], sizes = [32, 128], strides = [1, 1]} : vector<32x256xf32> to vector<32x128xf32>
    %78 = vector.extract_strided_slice %76 {offsets = [0, 128], sizes = [32, 128], strides = [1, 1]} : vector<32x256xf32> to vector<32x128xf32>
    %79 = arith.maximumf %77, %78 : vector<32x128xf32>
    %cst_43 = arith.constant 0.000000e+00 : f32
    %80 = vector.broadcast %cst_43 : f32 to vector<32x128xf32>
    %81 = arith.maximumf %79, %80 : vector<32x128xf32>
    %82 = arith.truncf %81 : vector<32x128xf32> to vector<32x128xbf16>
    %cst_44 = arith.constant 0.000000e+00 : f32
    %83 = vector.broadcast %cst_44 : f32 to vector<8x32xf32>
    %84 = vector.extract_strided_slice %82 {offsets = [0, 0], sizes = [8, 128], strides = [1, 1]} : vector<32x128xbf16> to vector<8x128xbf16>
    %c0_45 = arith.constant 0 : index
    %c0_46 = arith.constant 0 : index
    %c0_47 = arith.constant 0 : index
    %85 = vector.load %arg6[%c0_45, %c0_46, %c0_47] : memref<4x128x32xbf16, #tpu.memory_space<vmem>>, vector<1x128x32xbf16>
    %86 = vector.shape_cast %85 : vector<1x128x32xbf16> to vector<128x32xbf16>
    %cst_48 = arith.constant dense<0.000000e+00> : vector<8x32xf32>
    %87 = tpu.matmul %84, %86, %cst_48 {dimension_numbers = #tpu.dot_dimension_numbers<[1], [0], [0], [1], [0, 0, 1, 1], [], []>} : vector<8x128xbf16>, vector<128x32xbf16>, vector<8x32xf32> -> vector<8x32xf32>
    %88 = arith.addf %83, %87 : vector<8x32xf32>
    %89 = vector.extract_strided_slice %82 {offsets = [8, 0], sizes = [8, 128], strides = [1, 1]} : vector<32x128xbf16> to vector<8x128xbf16>
    %c1_49 = arith.constant 1 : index
    %c0_50 = arith.constant 0 : index
    %c0_51 = arith.constant 0 : index
    %90 = vector.load %arg6[%c1_49, %c0_50, %c0_51] : memref<4x128x32xbf16, #tpu.memory_space<vmem>>, vector<1x128x32xbf16>
    %91 = vector.shape_cast %90 : vector<1x128x32xbf16> to vector<128x32xbf16>
    %cst_52 = arith.constant dense<0.000000e+00> : vector<8x32xf32>
    %92 = tpu.matmul %89, %91, %cst_52 {dimension_numbers = #tpu.dot_dimension_numbers<[1], [0], [0], [1], [0, 0, 1, 1], [], []>} : vector<8x128xbf16>, vector<128x32xbf16>, vector<8x32xf32> -> vector<8x32xf32>
    %93 = arith.addf %88, %92 : vector<8x32xf32>
    %94 = vector.extract_strided_slice %82 {offsets = [16, 0], sizes = [8, 128], strides = [1, 1]} : vector<32x128xbf16> to vector<8x128xbf16>
    %c2_53 = arith.constant 2 : index
    %c0_54 = arith.constant 0 : index
    %c0_55 = arith.constant 0 : index
    %95 = vector.load %arg6[%c2_53, %c0_54, %c0_55] : memref<4x128x32xbf16, #tpu.memory_space<vmem>>, vector<1x128x32xbf16>
    %96 = vector.shape_cast %95 : vector<1x128x32xbf16> to vector<128x32xbf16>
    %cst_56 = arith.constant dense<0.000000e+00> : vector<8x32xf32>
    %97 = tpu.matmul %94, %96, %cst_56 {dimension_numbers = #tpu.dot_dimension_numbers<[1], [0], [0], [1], [0, 0, 1, 1], [], []>} : vector<8x128xbf16>, vector<128x32xbf16>, vector<8x32xf32> -> vector<8x32xf32>
    %98 = arith.addf %93, %97 : vector<8x32xf32>
    %99 = vector.extract_strided_slice %82 {offsets = [24, 0], sizes = [8, 128], strides = [1, 1]} : vector<32x128xbf16> to vector<8x128xbf16>
    %c3_57 = arith.constant 3 : index
    %c0_58 = arith.constant 0 : index
    %c0_59 = arith.constant 0 : index
    %100 = vector.load %arg6[%c3_57, %c0_58, %c0_59] : memref<4x128x32xbf16, #tpu.memory_space<vmem>>, vector<1x128x32xbf16>
    %101 = vector.shape_cast %100 : vector<1x128x32xbf16> to vector<128x32xbf16>
    %cst_60 = arith.constant dense<0.000000e+00> : vector<8x32xf32>
    %102 = tpu.matmul %99, %101, %cst_60 {dimension_numbers = #tpu.dot_dimension_numbers<[1], [0], [0], [1], [0, 0, 1, 1], [], []>} : vector<8x128xbf16>, vector<128x32xbf16>, vector<8x32xf32> -> vector<8x32xf32>
    %103 = arith.addf %98, %102 : vector<8x32xf32>
    %c0_61 = arith.constant 0 : index
    %c0_62 = arith.constant 0 : index
    %104 = vector.load %arg7[%c0_61, %c0_62] : memref<1x32xf32, #tpu.memory_space<vmem>>, vector<1x32xf32>
    %105 = vector.broadcast %104 : vector<1x32xf32> to vector<8x32xf32>
    %106 = arith.addf %103, %105 : vector<8x32xf32>
    %107 = arith.truncf %106 : vector<8x32xf32> to vector<8x32xbf16>
    %c0_63 = arith.constant 0 : index
    %c0_64 = arith.constant 0 : index
    %108 = vector.load %arg8[%c0_63, %c0_64] : memref<32x128xbf16, #tpu.memory_space<vmem>>, vector<32x128xbf16>
    %cst_65 = arith.constant dense<0.000000e+00> : vector<8x128xf32>
    %109 = tpu.matmul %107, %108, %cst_65 {dimension_numbers = #tpu.dot_dimension_numbers<[1], [0], [0], [1], [0, 0, 1, 1], [], []>} : vector<8x32xbf16>, vector<32x128xbf16>, vector<8x128xf32> -> vector<8x128xf32>
    %c0_66 = arith.constant 0 : index
    %c0_67 = arith.constant 0 : index
    %110 = vector.load %arg9[%c0_66, %c0_67] : memref<1x128xf32, #tpu.memory_space<vmem>>, vector<1x128xf32>
    %111 = vector.broadcast %110 : vector<1x128xf32> to vector<8x128xf32>
    %112 = arith.addf %109, %111 : vector<8x128xf32>
    %cst_68 = arith.constant dense<0xFF800000> : vector<8xf32>
    %113 = vector.multi_reduction <maximumf>, %112, %cst_68 [1] : vector<8x128xf32> to vector<8xf32>
    %114 = vector.shape_cast %113 : vector<8xf32> to vector<8x1xf32>
    %115 = vector.broadcast %114 : vector<8x1xf32> to vector<8x128xf32>
    %116 = arith.subf %112, %115 : vector<8x128xf32>
    %117 = math.exp %116 : vector<8x128xf32>
    %cst_69 = arith.constant dense<0.000000e+00> : vector<8xf32>
    %118 = vector.multi_reduction <add>, %117, %cst_69 [1] : vector<8x128xf32> to vector<8xf32>
    %119 = vector.shape_cast %118 : vector<8xf32> to vector<8x1xf32>
    %120 = math.log %119 : vector<8x1xf32>
    %121 = vector.broadcast %120 : vector<8x1xf32> to vector<8x128xf32>
    %122 = arith.subf %116, %121 : vector<8x128xf32>
    %c0_70 = arith.constant 0 : index
    %c0_71 = arith.constant 0 : index
    %123 = vector.load %arg10[%c0_70, %c0_71] : memref<8x128xf32, #tpu.memory_space<vmem>>, vector<8x128xf32>
    tpu.vector_store %arg10[%c0_70, %c0_71], %122 {strides = array<i32>} : memref<8x128xf32, #tpu.memory_space<vmem>>, vector<8x128xf32>,
    return
  }
  func.func @transform_0(%arg0: i32) -> (i32, i32, i32, i32) {
    %c0_i32 = arith.constant 0 : i32
    %c0_i32_0 = arith.constant 0 : i32
    %c0_i32_1 = arith.constant 0 : i32
    %c0_i32_2 = arith.constant 0 : i32
    return %arg0, %c0_i32, %c0_i32_0, %c0_i32_1 : i32, i32, i32, i32
  }
  func.func @transform_1(%arg0: i32) -> (i32, i32, i32) {
    %c0_i32 = arith.constant 0 : i32
    %c0_i32_0 = arith.constant 0 : i32
    %c0_i32_1 = arith.constant 0 : i32
    %c0_i32_2 = arith.constant 0 : i32
    return %c0_i32, %c0_i32_0, %c0_i32_1 : i32, i32, i32
  }
  func.func @transform_2(%arg0: i32) -> (i32, i32) {
    %c0_i32 = arith.constant 0 : i32
    %c0_i32_0 = arith.constant 0 : i32
    %c0_i32_1 = arith.constant 0 : i32
    return %c0_i32, %c0_i32_0 : i32, i32
  }
  func.func @transform_3(%arg0: i32) -> (i32, i32, i32) {
    %c0_i32 = arith.constant 0 : i32
    %c0_i32_0 = arith.constant 0 : i32
    %c0_i32_1 = arith.constant 0 : i32
    %c0_i32_2 = arith.constant 0 : i32
    return %c0_i32, %c0_i32_0, %c0_i32_1 : i32, i32, i32
  }
  func.func @transform_4(%arg0: i32) -> (i32, i32) {
    %c0_i32 = arith.constant 0 : i32
    %c0_i32_0 = arith.constant 0 : i32
    %c0_i32_1 = arith.constant 0 : i32
    return %c0_i32, %c0_i32_0 : i32, i32
  }
  func.func @transform_5(%arg0: i32) -> (i32, i32, i32) {
    %c0_i32 = arith.constant 0 : i32
    %c0_i32_0 = arith.constant 0 : i32
    %c0_i32_1 = arith.constant 0 : i32
    %c0_i32_2 = arith.constant 0 : i32
    return %c0_i32, %c0_i32_0, %c0_i32_1 : i32, i32, i32
  }
  func.func @transform_6(%arg0: i32) -> (i32, i32) {
    %c0_i32 = arith.constant 0 : i32
    %c0_i32_0 = arith.constant 0 : i32
    %c0_i32_1 = arith.constant 0 : i32
    return %c0_i32, %c0_i32_0 : i32, i32
  }
  func.func @transform_7(%arg0: i32) -> (i32, i32) {
    %c0_i32 = arith.constant 0 : i32
    %c0_i32_0 = arith.constant 0 : i32
    %c0_i32_1 = arith.constant 0 : i32
    return %c0_i32, %c0_i32_0 : i32, i32
  }
  func.func @transform_8(%arg0: i32) -> (i32, i32) {
    %c0_i32 = arith.constant 0 : i32
    %c0_i32_0 = arith.constant 0 : i32
    %c0_i32_1 = arith.constant 0 : i32
    return %c0_i32, %c0_i32_0 : i32, i32
  }
  func.func @transform_9(%arg0: i32) -> (i32, i32) {
    %c0_i32 = arith.constant 0 : i32
    %c0_i32_0 = arith.constant 0 : i32
    return %arg0, %c0_i32 : i32, i32
  }
}

</mosaic_0001>

<llo_original>
// kernel: simple_cnn_forward.1
$region0: #{simple_cnn_forward.1}
  #allocation0 [shape = 'u32[]', space=smem, size = 0x4, offset = 0x4, fixed_abs, tag = 'smem constant byte address 0x4 - core index']
  #allocation1 [shape = 'u32[144,128]{1,0:T(1,128)}', space=vmem, size = 0x12000, scoped, tag = 'internal scratch']
  %s0 = inlined_call_operand.vmem [shape: f32[1,28,8,28], index: 0, kind: input, shape index: {}]
  %s1 = inlined_call_operand.hbm [shape: bf16[5,28,256], index: 1, kind: input, shape index: {}]
  %s2 = inlined_call_operand.vmem [shape: f32[1,256], index: 2, kind: input, shape index: {}]
  %s3 = inlined_call_operand.vmem [shape: bf16[5,128,256], index: 3, kind: input, shape index: {}]
  %s4 = inlined_call_operand.hbm [shape: f32[1,256], index: 4, kind: input, shape index: {}]
  %s5 = inlined_call_operand.vmem [shape: bf16[4,128,32], index: 5, kind: input, shape index: {}]
  %s6 = inlined_call_operand.hbm [shape: f32[1,32], index: 6, kind: input, shape index: {}]
  %s7 = inlined_call_operand.vmem [shape: bf16[32,128], index: 7, kind: input, shape index: {}]
  %s8 = inlined_call_operand.hbm [shape: f32[1,128], index: 8, kind: input, shape index: {}]
  %s9 = inlined_call_operand.vmem [shape: f32[8,128], index: 9, kind: output, shape index: {}]
  %s10 = sld [smem:[#allocation0]]
  $region62: #{simple_cnn_forward.1} parent=0
    _
  %s12 = ssub.s32 1, %s10
  %s13 = scalar_select 0, %s12, %s10
  $region1: #{simple_cnn_forward.1} parent=0
    #allocation2 [shape = 'u8[81920]{0}', space=vmem, size = 0x14000, scoped, tag = 'input window, operand 1, single buffered']
    #allocation3 [shape = 's32[1]{0}', space=sflag, size = 0x4, scoped, tag = 'scoped memory for simple_cnn_forward.1']
    #allocation4 [shape = 'u8[1024]{0}', space=vmem, size = 0x400, scoped, tag = 'input window, operand 4, single buffered']
    #allocation5 [shape = 's32[1]{0}', space=sflag, size = 0x4, scoped, tag = 'scoped memory for simple_cnn_forward.1']
    #allocation6 [shape = 'u8[512]{0}', space=vmem, size = 0x400, scoped, tag = 'input window, operand 6, single buffered']
    #allocation7 [shape = 'u8[512]{0}', space=vmem, size = 0x400, scoped, tag = 'input window, operand 8, single buffered']
    #allocation8 [shape = 's32[1]{0}', space=sflag, size = 0x4, scoped, tag = 'scoped memory for simple_cnn_forward.1']
    %14 = vsyncpa [#allocation3], 0
    %15 = vsyncpa [#allocation5], 0
    %16 = vsyncpa [#allocation8], 0
    // Predicated region
    $region2: #{simple_cnn_forward.1} parent=1 // pred_check
      _
    $region3: #{simple_cnn_forward.1} parent=1 // pred_check_branch
      %18 = sbr.rel (0) target = $region5
    $region4: #{simple_cnn_forward.1} parent=1 // pred_region
      _
    $region5: #{simple_cnn_forward.1} parent=1 // pred_fallthru
      _
    // Predicated region
    $region6: #{simple_cnn_forward.1} parent=1 // pred_check
      _
    $region7: #{simple_cnn_forward.1} parent=1 // pred_check_branch
      %20 = sbr.rel (0) target = $region9
    $region8: #{simple_cnn_forward.1} parent=1 // pred_region
      %s22 = ssub.s32 2560, 2560
      %23 = vsyncadd [#allocation3], %s22
      %s24 = sshll.u32 [#allocation2], 4
      %s25 = int_to_ptr.vmem [resolvable:$true] %s24
      %30 = dma.hbm_to_vmem [thread:$0]  %s1, 2560, %s25, [#allocation3], 128, 128, 8
    $region9: #{simple_cnn_forward.1} parent=1 // pred_fallthru
      _
    // Predicated region
    $region10: #{simple_cnn_forward.1} parent=1 // pred_check
      _
    $region11: #{simple_cnn_forward.1} parent=1 // pred_check_branch
      %32 = sbr.rel (0) target = $region13
    $region12: #{simple_cnn_forward.1} parent=1 // pred_region
      _
    $region13: #{simple_cnn_forward.1} parent=1 // pred_fallthru
      _
    // Predicated region
    $region14: #{simple_cnn_forward.1} parent=1 // pred_check
      _
    $region15: #{simple_cnn_forward.1} parent=1 // pred_check_branch
      %34 = sbr.rel (0) target = $region17
    $region16: #{simple_cnn_forward.1} parent=1 // pred_region
      _
    $region17: #{simple_cnn_forward.1} parent=1 // pred_fallthru
      _
    // Predicated region
    $region18: #{simple_cnn_forward.1} parent=1 // pred_check
      _
    $region19: #{simple_cnn_forward.1} parent=1 // pred_check_branch
      %36 = sbr.rel (0) target = $region21
    $region20: #{simple_cnn_forward.1} parent=1 // pred_region
      %s38 = ssub.s32 32, 32
      %39 = vsyncadd [#allocation5], %s38
      %s41 = sshll.u32 [#allocation4], 4
      %s42 = int_to_ptr.vmem [resolvable:$true] %s41
      %44 = dma.hbm_to_vmem [thread:$0]  %s4, 32, %s42, [#allocation5]
    $region21: #{simple_cnn_forward.1} parent=1 // pred_fallthru
      _
    // Predicated region
    $region22: #{simple_cnn_forward.1} parent=1 // pred_check
      _
    $region23: #{simple_cnn_forward.1} parent=1 // pred_check_branch
      %46 = sbr.rel (0) target = $region25
    $region24: #{simple_cnn_forward.1} parent=1 // pred_region
      _
    $region25: #{simple_cnn_forward.1} parent=1 // pred_fallthru
      _
    // Predicated region
    $region26: #{simple_cnn_forward.1} parent=1 // pred_check
      _
    $region27: #{simple_cnn_forward.1} parent=1 // pred_check_branch
      %48 = sbr.rel (0) target = $region29
    $region28: #{simple_cnn_forward.1} parent=1 // pred_region
      %s50 = ssub.s32 16, 16
      %51 = vsyncadd [#allocation5], %s50
      %s53 = sshll.u32 [#allocation6], 4
      %s54 = int_to_ptr.vmem [resolvable:$true] %s53
      %56 = dma.hbm_to_vmem [thread:$0]  %s6, 16, %s54, [#allocation5]
    $region29: #{simple_cnn_forward.1} parent=1 // pred_fallthru
      _
    // Predicated region
    $region30: #{simple_cnn_forward.1} parent=1 // pred_check
      _
    $region31: #{simple_cnn_forward.1} parent=1 // pred_check_branch
      %58 = sbr.rel (0) target = $region33
    $region32: #{simple_cnn_forward.1} parent=1 // pred_region
      _
    $region33: #{simple_cnn_forward.1} parent=1 // pred_fallthru
      _
    // Predicated region
    $region34: #{simple_cnn_forward.1} parent=1 // pred_check
      _
    $region35: #{simple_cnn_forward.1} parent=1 // pred_check_branch
      %60 = sbr.rel (0) target = $region37
    $region36: #{simple_cnn_forward.1} parent=1 // pred_region
      %s62 = ssub.s32 16, 16
      %63 = vsyncadd [#allocation8], %s62
      %s65 = sshll.u32 [#allocation7], 4
      %s66 = int_to_ptr.vmem [resolvable:$true] %s65
      %68 = dma.hbm_to_vmem [thread:$0]  %s8, 16, %s66, [#allocation8]
    $region37: #{simple_cnn_forward.1} parent=1 // pred_fallthru
      _
    // Predicated region
    $region38: #{simple_cnn_forward.1} parent=1 // pred_check
      _
    $region39: #{simple_cnn_forward.1} parent=1 // pred_check_branch
      %70 = sbr.rel (0) target = $region41
    $region40: #{simple_cnn_forward.1} parent=1 // pred_region
      %71 = dma.done [#allocation3], 2560
    $region41: #{simple_cnn_forward.1} parent=1 // pred_fallthru
      _
    // Predicated region
    $region42: #{simple_cnn_forward.1} parent=1 // pred_check
      _
    $region43: #{simple_cnn_forward.1} parent=1 // pred_check_branch
      %73 = sbr.rel (0) target = $region45
    $region44: #{simple_cnn_forward.1} parent=1 // pred_region
      %74 = dma.done [#allocation5], 32
    $region45: #{simple_cnn_forward.1} parent=1 // pred_fallthru
      _
    // Predicated region
    $region46: #{simple_cnn_forward.1} parent=1 // pred_check
      _
    $region47: #{simple_cnn_forward.1} parent=1 // pred_check_branch
      %76 = sbr.rel (0) target = $region49
    $region48: #{simple_cnn_forward.1} parent=1 // pred_region
      %77 = dma.done [#allocation5], 16
    $region49: #{simple_cnn_forward.1} parent=1 // pred_fallthru
      _
    // Predicated region
    $region50: #{simple_cnn_forward.1} parent=1 // pred_check
      _
    $region51: #{simple_cnn_forward.1} parent=1 // pred_check_branch
      %79 = sbr.rel (0) target = $region53
    $region52: #{simple_cnn_forward.1} parent=1 // pred_region
      %80 = dma.done [#allocation8], 16
    $region53: #{simple_cnn_forward.1} parent=1 // pred_fallthru
      _
    %v82 = vld [vmem:[%s0] sm:$0xff]
    %v83 = vld [vmem:[%s0 + $0x8] sm:$0xff]
    %v84 = vld [vmem:[%s0 + $0x10] sm:$0xff]
    %v85 = vld [vmem:[%s0 + $0x18] sm:$0xff]
    %v86 = vld [vmem:[%s0 + $0x20] sm:$0xff]
    %v87 = vld [vmem:[%s0 + $0x28] sm:$0xff]
    %v88 = vld [vmem:[%s0 + $0x30] sm:$0xff]
    %v89 = vld [vmem:[%s0 + $0x38] sm:$0xff]
    %v90 = vld [vmem:[%s0 + $0x40] sm:$0xff]
    %v91 = vld [vmem:[%s0 + $0x48] sm:$0xff]
    %v92 = vld [vmem:[%s0 + $0x50] sm:$0xff]
    %v93 = vld [vmem:[%s0 + $0x58] sm:$0xff]
    %v94 = vld [vmem:[%s0 + $0x60] sm:$0xff]
    %v95 = vld [vmem:[%s0 + $0x68] sm:$0xff]
    %v96 = vld [vmem:[%s0 + $0x70] sm:$0xff]
    %v97 = vld [vmem:[%s0 + $0x78] sm:$0xff]
    %v98 = vld [vmem:[%s0 + $0x80] sm:$0xff]
    %v99 = vld [vmem:[%s0 + $0x88] sm:$0xff]
    %v100 = vld [vmem:[%s0 + $0x90] sm:$0xff]
    %v101 = vld [vmem:[%s0 + $0x98] sm:$0xff]
    %v102 = vld [vmem:[%s0 + $0xa0] sm:$0xff]
    %v103 = vld [vmem:[%s0 + $0xa8] sm:$0xff]
    %v104 = vld [vmem:[%s0 + $0xb0] sm:$0xff]
    %v105 = vld [vmem:[%s0 + $0xb8] sm:$0xff]
    %v106 = vld [vmem:[%s0 + $0xc0] sm:$0xff]
    %v107 = vld [vmem:[%s0 + $0xc8] sm:$0xff]
    %v108 = vld [vmem:[%s0 + $0xd0] sm:$0xff]
    %v109 = vld [vmem:[%s0 + $0xd8] sm:$0xff]
    %v110 = vpack.c.bf16 %v83, %v82
    %v111 = vpack.c.bf16 %v85, %v84
    %v112 = vpack.c.bf16 %v87, %v86
    %v113 = vpack.c.bf16 %v89, %v88
    %v114 = vpack.c.bf16 %v91, %v90
    %v115 = vpack.c.bf16 %v93, %v92
    %v116 = vpack.c.bf16 %v95, %v94
    %v117 = vpack.c.bf16 %v97, %v96
    %v118 = vpack.c.bf16 %v99, %v98
    %v119 = vpack.c.bf16 %v101, %v100
    %v120 = vpack.c.bf16 %v103, %v102
    %v121 = vpack.c.bf16 %v105, %v104
    %v122 = vpack.c.bf16 %v107, %v106
    %v123 = vpack.c.bf16 %v109, %v108
    %v124 = vld [vmem:[#allocation2] sm:$0xff]
    %v125 = vld [vmem:[#allocation2 + $0x8] sm:$0xff]
    %v126 = vld [vmem:[#allocation2 + $0x10] sm:$0xff]
    %v127 = vld [vmem:[#allocation2 + $0x18] sm:$0x33]
    %s128 = scalar_lea.vmem [#allocation2], 32
    %v129 = vld [vmem:[%s128] sm:$0xff]
    %v130 = vld [vmem:[%s128 + $0x8] sm:$0xff]
    %v131 = vld [vmem:[%s128 + $0x10] sm:$0xff]
    %v132 = vld [vmem:[%s128 + $0x18] sm:$0x33]
    %vm146 = vcmask 1043456
    %v147 = vrot.slane %v110, 4
    %v148 = vrot.slane %v111, 4
    %v149 = vsel %vm146, %v147, %v148
    %v150 = vrot.slane %v112, 4
    %v151 = vsel %vm146, %v148, %v150
    %v152 = vrot.slane %v113, 4
    %v153 = vsel %vm146, %v150, %v152
    %v154 = vrot.slane %v114, 4
    %v155 = vsel %vm146, %v152, %v154
    %v156 = vrot.slane %v115, 4
    %v157 = vsel %vm146, %v154, %v156
    %v158 = vrot.slane %v116, 4
    %v159 = vsel %vm146, %v156, %v158
    %v160 = vrot.slane %v117, 4
    %v161 = vsel %vm146, %v158, %v160
    %v162 = vrot.slane %v118, 4
    %v163 = vsel %vm146, %v160, %v162
    %v164 = vrot.slane %v119, 4
    %v165 = vsel %vm146, %v162, %v164
    %v166 = vrot.slane %v120, 4
    %v167 = vsel %vm146, %v164, %v166
    %v168 = vrot.slane %v121, 4
    %v169 = vsel %vm146, %v166, %v168
    %v170 = vrot.slane %v122, 4
    %v171 = vsel %vm146, %v168, %v170
    %v176 = vunpack.c.l.b16 %v129
    %v177 = vunpack.c.h.b16 %v129
    %v178 = vunpack.c.l.b16 %v130
    %v179 = vunpack.c.h.b16 %v130
    %v180 = vunpack.c.l.b16 %v131
    %v181 = vunpack.c.h.b16 %v131
    %v182 = vunpack.c.l.b16 %v132
    %v183 = vunpack.c.h.b16 %v132
    %v184 = vpack.c.b16 %v178, %v176
    %v185 = vpack.c.b16 %v179, %v177
    %v186 = vpack.c.b16 %v182, %v180
    %v187 = vpack.c.b16 %v183, %v181
    %vm190 = vcmask 228352
    %v192 = vsel %vm190, %v149, 0
    %v195 = vsel %vm190, %v151, 0
    %v198 = vsel %vm190, %v153, 0
    %v201 = vsel %vm190, %v155, 0
    %v204 = vsel %vm190, %v157, 0
    %v207 = vsel %vm190, %v159, 0
    %v210 = vsel %vm190, %v161, 0
    %v213 = vsel %vm190, %v163, 0
    %v216 = vsel %vm190, %v165, 0
    %v219 = vsel %vm190, %v167, 0
    %v222 = vsel %vm190, %v169, 0
    %v225 = vsel %vm190, %v171, 0
    %vm227 = vcmask 1045504
    %v229 = vsel %vm227, %v186, 0
    %v232 = vsel %vm227, %v187, 0
    %234 = vmatprep.subr.bf16.mxu0 0
    %235 = vmatpush1.bf16.msra.mxu0 0
    %236 = vmatprep.subr.bf16.mxu0 0
    %237 = vmatpush1.bf16.msra.mxu0 0
    %238 = vmatprep.subr.bf16.mxu0 0
    %239 = vmatpush1.bf16.msra.mxu0 0
    %240 = vmatprep.subr.bf16.mxu0 0
    %241 = vmatpush1.bf16.msra.mxu0 0
    %242 = vmatprep.subr.bf16.mxu0 0
    %243 = vmatpush1.bf16.msra.mxu0 0
    %244 = vmatprep.subr.bf16.mxu0 0
    %245 = vmatpush1.bf16.msra.mxu0 0
    %246 = vmatprep.subr.bf16.mxu0 %v232
    %247 = vmatpush1.bf16.msra.mxu0 %v229
    %248 = vmatprep.subr.bf16.mxu0 %v185
    %249 = vmatpush1.bf16.msra.mxu0 %v184
    %250 = vmatprep.subr.bf16.mxu0 0
    %251 = vmatpush2.bf16.msra.mxu0 0
    %252 = vmatprep.subr.bf16.mxu0 0
    %253 = vmatpush2.bf16.msra.mxu0 0
    %254 = vmatprep.subr.bf16.mxu0 0
    %255 = vmatpush2.bf16.msra.mxu0 0
    %256 = vmatprep.subr.bf16.mxu0 0
    %257 = vmatpush2.bf16.msra.mxu0 0
    %258 = vmatprep.subr.bf16.mxu0 0
    %259 = vmatpush2.bf16.msra.mxu0 0
    %260 = vmatprep.subr.bf16.mxu0 0
    %261 = vmatpush2.bf16.msra.mxu0 0
    %262 = vmatprep.subr.bf16.mxu0 0
    %263 = vmatpush2.bf16.msra.mxu0 0
    %264 = vmatprep.subr.bf16.mxu0 0
    %265 = vmatpush2.bf16.msra.mxu0 0
    %266 = vmatprep.mubr.bf16.mxu0 0
    %267 = vmatmul.mubr.bf16.gmra.mxu0 %v192
    %v268 = vpop.f32.mrf.mxu0
    %v269 = vadd.f32 0.0, %v268
    %v270 = vpop.f32.mrf.mxu0
    %v271 = vadd.f32 0.0, %v270
    %v272 = vpop.f32.mrf.mxu0
    %v273 = vadd.f32 0.0, %v272
    %v274 = vpop.f32.mrf.mxu0
    %v275 = vadd.f32 0.0, %v274
    %276 = vmatprep.mubr.bf16.mxu0 0
    %277 = vmatmul.mubr.bf16.gmra.mxu0 %v195
    %v278 = vpop.f32.mrf.mxu0
    %v279 = vadd.f32 0.0, %v278
    %v280 = vpop.f32.mrf.mxu0
    %v281 = vadd.f32 0.0, %v280
    %v282 = vpop.f32.mrf.mxu0
    %v283 = vadd.f32 0.0, %v282
    %v284 = vpop.f32.mrf.mxu0
    %v285 = vadd.f32 0.0, %v284
    %286 = vmatprep.mubr.bf16.mxu0 0
    %287 = vmatmul.mubr.bf16.gmra.mxu0 %v198
    %v288 = vpop.f32.mrf.mxu0
    %v289 = vadd.f32 0.0, %v288
    %v290 = vpop.f32.mrf.mxu0
    %v291 = vadd.f32 0.0, %v290
    %v292 = vpop.f32.mrf.mxu0
    %v293 = vadd.f32 0.0, %v292
    %v294 = vpop.f32.mrf.mxu0
    %v295 = vadd.f32 0.0, %v294
    %296 = vmatprep.mubr.bf16.mxu0 0
    %297 = vmatmul.mubr.bf16.gmra.mxu0 %v201
    %v298 = vpop.f32.mrf.mxu0
    %v299 = vadd.f32 0.0, %v298
    %v300 = vpop.f32.mrf.mxu0
    %v301 = vadd.f32 0.0, %v300
    %v302 = vpop.f32.mrf.mxu0
    %v303 = vadd.f32 0.0, %v302
    %v304 = vpop.f32.mrf.mxu0
    %v305 = vadd.f32 0.0, %v304
    %306 = vmatprep.mubr.bf16.mxu0 0
    %307 = vmatmul.mubr.bf16.gmra.mxu0 %v204
    %v308 = vpop.f32.mrf.mxu0
    %v309 = vadd.f32 0.0, %v308
    %v310 = vpop.f32.mrf.mxu0
    %v311 = vadd.f32 0.0, %v310
    %v312 = vpop.f32.mrf.mxu0
    %v313 = vadd.f32 0.0, %v312
    %v314 = vpop.f32.mrf.mxu0
    %v315 = vadd.f32 0.0, %v314
    %316 = vmatprep.mubr.bf16.mxu0 0
    %317 = vmatmul.mubr.bf16.gmra.mxu0 %v207
    %v318 = vpop.f32.mrf.mxu0
    %v319 = vadd.f32 0.0, %v318
    %v320 = vpop.f32.mrf.mxu0
    %v321 = vadd.f32 0.0, %v320
    %v322 = vpop.f32.mrf.mxu0
    %v323 = vadd.f32 0.0, %v322
    %v324 = vpop.f32.mrf.mxu0
    %v325 = vadd.f32 0.0, %v324
    %326 = vmatprep.mubr.bf16.mxu0 0
    %327 = vmatmul.mubr.bf16.gmra.mxu0 %v210
    %v328 = vpop.f32.mrf.mxu0
    %v329 = vadd.f32 0.0, %v328
    %v330 = vpop.f32.mrf.mxu0
    %v331 = vadd.f32 0.0, %v330
    %v332 = vpop.f32.mrf.mxu0
    %v333 = vadd.f32 0.0, %v332
    %v334 = vpop.f32.mrf.mxu0
    %v335 = vadd.f32 0.0, %v334
    %336 = vmatprep.mubr.bf16.mxu0 0
    %337 = vmatmul.mubr.bf16.gmra.mxu0 %v213
    %v338 = vpop.f32.mrf.mxu0
    %v339 = vadd.f32 0.0, %v338
    %v340 = vpop.f32.mrf.mxu0
    %v341 = vadd.f32 0.0, %v340
    %v342 = vpop.f32.mrf.mxu0
    %v343 = vadd.f32 0.0, %v342
    %v344 = vpop.f32.mrf.mxu0
    %v345 = vadd.f32 0.0, %v344
    %346 = vmatprep.mubr.bf16.mxu0 0
    %347 = vmatmul.mubr.bf16.gmra.mxu0 %v216
    %v348 = vpop.f32.mrf.mxu0
    %v349 = vadd.f32 0.0, %v348
    %v350 = vpop.f32.mrf.mxu0
    %v351 = vadd.f32 0.0, %v350
    %v352 = vpop.f32.mrf.mxu0
    %v353 = vadd.f32 0.0, %v352
    %v354 = vpop.f32.mrf.mxu0
    %v355 = vadd.f32 0.0, %v354
    %356 = vmatprep.mubr.bf16.mxu0 0
    %357 = vmatmul.mubr.bf16.gmra.mxu0 %v219
    %v358 = vpop.f32.mrf.mxu0
    %v359 = vadd.f32 0.0, %v358
    %v360 = vpop.f32.mrf.mxu0
    %v361 = vadd.f32 0.0, %v360
    %v362 = vpop.f32.mrf.mxu0
    %v363 = vadd.f32 0.0, %v362
    %v364 = vpop.f32.mrf.mxu0
    %v365 = vadd.f32 0.0, %v364
    %366 = vmatprep.mubr.bf16.mxu0 0
    %367 = vmatmul.mubr.bf16.gmra.mxu0 %v222
    %v368 = vpop.f32.mrf.mxu0
    %v369 = vadd.f32 0.0, %v368
    %v370 = vpop.f32.mrf.mxu0
    %v371 = vadd.f32 0.0, %v370
    %v372 = vpop.f32.mrf.mxu0
    %v373 = vadd.f32 0.0, %v372
    %v374 = vpop.f32.mrf.mxu0
    %v375 = vadd.f32 0.0, %v374
    %376 = vmatprep.mubr.bf16.mxu0 0
    %377 = vmatmul.mubr.bf16.gmra.mxu0 %v225
    %v378 = vpop.f32.mrf.mxu0
    %v379 = vadd.f32 0.0, %v378
    %v380 = vpop.f32.mrf.mxu0
    %v381 = vadd.f32 0.0, %v380
    %v382 = vpop.f32.mrf.mxu0
    %v383 = vadd.f32 0.0, %v382
    %v384 = vpop.f32.mrf.mxu0
    %v385 = vadd.f32 0.0, %v384
    %386 = vdwg.mxu0
    %v391 = vunpack.c.l.b16 %v124
    %v392 = vunpack.c.h.b16 %v124
    %v393 = vunpack.c.l.b16 %v125
    %v394 = vunpack.c.h.b16 %v125
    %v395 = vunpack.c.l.b16 %v126
    %v396 = vunpack.c.h.b16 %v126
    %v397 = vunpack.c.l.b16 %v127
    %v398 = vunpack.c.h.b16 %v127
    %v399 = vpack.c.b16 %v393, %v391
    %v400 = vpack.c.b16 %v394, %v392
    %v401 = vpack.c.b16 %v397, %v395
    %v402 = vpack.c.b16 %v398, %v396
    %v406 = vsel %vm190, %v110, 0
    %v409 = vsel %vm190, %v111, 0
    %v412 = vsel %vm190, %v112, 0
    %v415 = vsel %vm190, %v113, 0
    %v418 = vsel %vm190, %v114, 0
    %v421 = vsel %vm190, %v115, 0
    %v424 = vsel %vm190, %v116, 0
    %v427 = vsel %vm190, %v117, 0
    %v430 = vsel %vm190, %v118, 0
    %v433 = vsel %vm190, %v119, 0
    %v436 = vsel %vm190, %v120, 0
    %v439 = vsel %vm190, %v121, 0
    %v442 = vsel %vm227, %v401, 0
    %v445 = vsel %vm227, %v402, 0
    %447 = vmatprep.subr.bf16.mxu0 0
    %448 = vmatpush1.bf16.msra.mxu0 0
    %449 = vmatprep.subr.bf16.mxu0 0
    %450 = vmatpush1.bf16.msra.mxu0 0
    %451 = vmatprep.subr.bf16.mxu0 0
    %452 = vmatpush1.bf16.msra.mxu0 0
    %453 = vmatprep.subr.bf16.mxu0 0
    %454 = vmatpush1.bf16.msra.mxu0 0
    %455 = vmatprep.subr.bf16.mxu0 0
    %456 = vmatpush1.bf16.msra.mxu0 0
    %457 = vmatprep.subr.bf16.mxu0 0
    %458 = vmatpush1.bf16.msra.mxu0 0
    %459 = vmatprep.subr.bf16.mxu0 %v445
    %460 = vmatpush1.bf16.msra.mxu0 %v442
    %461 = vmatprep.subr.bf16.mxu0 %v400
    %462 = vmatpush1.bf16.msra.mxu0 %v399
    %463 = vmatprep.subr.bf16.mxu0 0
    %464 = vmatpush2.bf16.msra.mxu0 0
    %465 = vmatprep.subr.bf16.mxu0 0
    %466 = vmatpush2.bf16.msra.mxu0 0
    %467 = vmatprep.subr.bf16.mxu0 0
    %468 = vmatpush2.bf16.msra.mxu0 0
    %469 = vmatprep.subr.bf16.mxu0 0
    %470 = vmatpush2.bf16.msra.mxu0 0
    %471 = vmatprep.subr.bf16.mxu0 0
    %472 = vmatpush2.bf16.msra.mxu0 0
    %473 = vmatprep.subr.bf16.mxu0 0
    %474 = vmatpush2.bf16.msra.mxu0 0
    %475 = vmatprep.subr.bf16.mxu0 0
    %476 = vmatpush2.bf16.msra.mxu0 0
    %477 = vmatprep.subr.bf16.mxu0 0
    %478 = vmatpush2.bf16.msra.mxu0 0
    %479 = vmatprep.mubr.bf16.mxu0 0
    %480 = vmatmul.mubr.bf16.gmra.mxu0 %v406
    %v481 = vpop.f32.mrf.mxu0
    %v482 = vadd.f32 %v269, %v481
    %v483 = vpop.f32.mrf.mxu0
    %v484 = vadd.f32 %v271, %v483
    %v485 = vpop.f32.mrf.mxu0
    %v486 = vadd.f32 %v273, %v485
    %v487 = vpop.f32.mrf.mxu0
    %v488 = vadd.f32 %v275, %v487
    %489 = vmatprep.mubr.bf16.mxu0 0
    %490 = vmatmul.mubr.bf16.gmra.mxu0 %v409
    %v491 = vpop.f32.mrf.mxu0
    %v492 = vadd.f32 %v279, %v491
    %v493 = vpop.f32.mrf.mxu0
    %v494 = vadd.f32 %v281, %v493
    %v495 = vpop.f32.mrf.mxu0
    %v496 = vadd.f32 %v283, %v495
    %v497 = vpop.f32.mrf.mxu0
    %v498 = vadd.f32 %v285, %v497
    %499 = vmatprep.mubr.bf16.mxu0 0
    %500 = vmatmul.mubr.bf16.gmra.mxu0 %v412
    %v501 = vpop.f32.mrf.mxu0
    %v502 = vadd.f32 %v289, %v501
    %v503 = vpop.f32.mrf.mxu0
    %v504 = vadd.f32 %v291, %v503
    %v505 = vpop.f32.mrf.mxu0
    %v506 = vadd.f32 %v293, %v505
    %v507 = vpop.f32.mrf.mxu0
    %v508 = vadd.f32 %v295, %v507
    %509 = vmatprep.mubr.bf16.mxu0 0
    %510 = vmatmul.mubr.bf16.gmra.mxu0 %v415
    %v511 = vpop.f32.mrf.mxu0
    %v512 = vadd.f32 %v299, %v511
    %v513 = vpop.f32.mrf.mxu0
    %v514 = vadd.f32 %v301, %v513
    %v515 = vpop.f32.mrf.mxu0
    %v516 = vadd.f32 %v303, %v515
    %v517 = vpop.f32.mrf.mxu0
    %v518 = vadd.f32 %v305, %v517
    %519 = vmatprep.mubr.bf16.mxu0 0
    %520 = vmatmul.mubr.bf16.gmra.mxu0 %v418
    %v521 = vpop.f32.mrf.mxu0
    %v522 = vadd.f32 %v309, %v521
    %v523 = vpop.f32.mrf.mxu0
    %v524 = vadd.f32 %v311, %v523
    %v525 = vpop.f32.mrf.mxu0
    %v526 = vadd.f32 %v313, %v525
    %v527 = vpop.f32.mrf.mxu0
    %v528 = vadd.f32 %v315, %v527
    %529 = vmatprep.mubr.bf16.mxu0 0
    %530 = vmatmul.mubr.bf16.gmra.mxu0 %v421
    %v531 = vpop.f32.mrf.mxu0
    %v532 = vadd.f32 %v319, %v531
    %v533 = vpop.f32.mrf.mxu0
    %v534 = vadd.f32 %v321, %v533
    %v535 = vpop.f32.mrf.mxu0
    %v536 = vadd.f32 %v323, %v535
    %v537 = vpop.f32.mrf.mxu0
    %v538 = vadd.f32 %v325, %v537
    %539 = vmatprep.mubr.bf16.mxu0 0
    %540 = vmatmul.mubr.bf16.gmra.mxu0 %v424
    %v541 = vpop.f32.mrf.mxu0
    %v542 = vadd.f32 %v329, %v541
    %v543 = vpop.f32.mrf.mxu0
    %v544 = vadd.f32 %v331, %v543
    %v545 = vpop.f32.mrf.mxu0
    %v546 = vadd.f32 %v333, %v545
    %v547 = vpop.f32.mrf.mxu0
    %v548 = vadd.f32 %v335, %v547
    %549 = vmatprep.mubr.bf16.mxu0 0
    %550 = vmatmul.mubr.bf16.gmra.mxu0 %v427
    %v551 = vpop.f32.mrf.mxu0
    %v552 = vadd.f32 %v339, %v551
    %v553 = vpop.f32.mrf.mxu0
    %v554 = vadd.f32 %v341, %v553
    %v555 = vpop.f32.mrf.mxu0
    %v556 = vadd.f32 %v343, %v555
    %v557 = vpop.f32.mrf.mxu0
    %v558 = vadd.f32 %v345, %v557
    %559 = vmatprep.mubr.bf16.mxu0 0
    %560 = vmatmul.mubr.bf16.gmra.mxu0 %v430
    %v561 = vpop.f32.mrf.mxu0
    %v562 = vadd.f32 %v349, %v561
    %v563 = vpop.f32.mrf.mxu0
    %v564 = vadd.f32 %v351, %v563
    %v565 = vpop.f32.mrf.mxu0
    %v566 = vadd.f32 %v353, %v565
    %v567 = vpop.f32.mrf.mxu0
    %v568 = vadd.f32 %v355, %v567
    %569 = vmatprep.mubr.bf16.mxu0 0
    %570 = vmatmul.mubr.bf16.gmra.mxu0 %v433
    %v571 = vpop.f32.mrf.mxu0
    %v572 = vadd.f32 %v359, %v571
    %v573 = vpop.f32.mrf.mxu0
    %v574 = vadd.f32 %v361, %v573
    %v575 = vpop.f32.mrf.mxu0
    %v576 = vadd.f32 %v363, %v575
    %v577 = vpop.f32.mrf.mxu0
    %v578 = vadd.f32 %v365, %v577
    %579 = vmatprep.mubr.bf16.mxu0 0
    %580 = vmatmul.mubr.bf16.gmra.mxu0 %v436
    %v581 = vpop.f32.mrf.mxu0
    %v582 = vadd.f32 %v369, %v581
    %v583 = vpop.f32.mrf.mxu0
    %v584 = vadd.f32 %v371, %v583
    %v585 = vpop.f32.mrf.mxu0
    %v586 = vadd.f32 %v373, %v585
    %v587 = vpop.f32.mrf.mxu0
    %v588 = vadd.f32 %v375, %v587
    %589 = vmatprep.mubr.bf16.mxu0 0
    %590 = vmatmul.mubr.bf16.gmra.mxu0 %v439
    %v591 = vpop.f32.mrf.mxu0
    %v592 = vadd.f32 %v379, %v591
    %v593 = vpop.f32.mrf.mxu0
    %v594 = vadd.f32 %v381, %v593
    %v595 = vpop.f32.mrf.mxu0
    %v596 = vadd.f32 %v383, %v595
    %v597 = vpop.f32.mrf.mxu0
    %v598 = vadd.f32 %v385, %v597
    %599 = vdwg.mxu0
    %s600 = scalar_lea.vmem [#allocation2], 64
    %v601 = vld [vmem:[%s600] sm:$0xff]
    %v602 = vld [vmem:[%s600 + $0x8] sm:$0xff]
    %v603 = vld [vmem:[%s600 + $0x10] sm:$0xff]
    %v604 = vld [vmem:[%s600 + $0x18] sm:$0x33]
    %v609 = vunpack.c.l.b16 %v601
    %v610 = vunpack.c.h.b16 %v601
    %v611 = vunpack.c.l.b16 %v602
    %v612 = vunpack.c.h.b16 %v602
    %v613 = vunpack.c.l.b16 %v603
    %v614 = vunpack.c.h.b16 %v603
    %v615 = vunpack.c.l.b16 %v604
    %v616 = vunpack.c.h.b16 %v604
    %v617 = vpack.c.b16 %v611, %v609
    %v618 = vpack.c.b16 %v612, %v610
    %v619 = vpack.c.b16 %v615, %v613
    %v620 = vpack.c.b16 %v616, %v614
    %v624 = vsel %vm190, %v122, 0
    %v627 = vsel %vm227, %v619, 0
    %v630 = vsel %vm227, %v620, 0
    %632 = vmatprep.subr.bf16.mxu0 0
    %633 = vmatpush1.bf16.msra.mxu0 0
    %634 = vmatprep.subr.bf16.mxu0 0
    %635 = vmatpush1.bf16.msra.mxu0 0
    %636 = vmatprep.subr.bf16.mxu0 0
    %637 = vmatpush1.bf16.msra.mxu0 0
    %638 = vmatprep.subr.bf16.mxu0 0
    %639 = vmatpush1.bf16.msra.mxu0 0
    %640 = vmatprep.subr.bf16.mxu0 0
    %641 = vmatpush1.bf16.msra.mxu0 0
    %642 = vmatprep.subr.bf16.mxu0 0
    %643 = vmatpush1.bf16.msra.mxu0 0
    %644 = vmatprep.subr.bf16.mxu0 %v630
    %645 = vmatpush1.bf16.msra.mxu0 %v627
    %646 = vmatprep.subr.bf16.mxu0 %v618
    %647 = vmatpush1.bf16.msra.mxu0 %v617
    %648 = vmatprep.subr.bf16.mxu0 0
    %649 = vmatpush2.bf16.msra.mxu0 0
    %650 = vmatprep.subr.bf16.mxu0 0
    %651 = vmatpush2.bf16.msra.mxu0 0
    %652 = vmatprep.subr.bf16.mxu0 0
    %653 = vmatpush2.bf16.msra.mxu0 0
    %654 = vmatprep.subr.bf16.mxu0 0
    %655 = vmatpush2.bf16.msra.mxu0 0
    %656 = vmatprep.subr.bf16.mxu0 0
    %657 = vmatpush2.bf16.msra.mxu0 0
    %658 = vmatprep.subr.bf16.mxu0 0
    %659 = vmatpush2.bf16.msra.mxu0 0
    %660 = vmatprep.subr.bf16.mxu0 0
    %661 = vmatpush2.bf16.msra.mxu0 0
    %662 = vmatprep.subr.bf16.mxu0 0
    %663 = vmatpush2.bf16.msra.mxu0 0
    %664 = vmatprep.mubr.bf16.mxu0 0
    %665 = vmatmul.mubr.bf16.gmra.mxu0 %v409
    %v666 = vpop.f32.mrf.mxu0
    %v667 = vadd.f32 0.0, %v666
    %v668 = vpop.f32.mrf.mxu0
    %v669 = vadd.f32 0.0, %v668
    %v670 = vpop.f32.mrf.mxu0
    %v671 = vadd.f32 0.0, %v670
    %v672 = vpop.f32.mrf.mxu0
    %v673 = vadd.f32 0.0, %v672
    %674 = vmatprep.mubr.bf16.mxu0 0
    %675 = vmatmul.mubr.bf16.gmra.mxu0 %v412
    %v676 = vpop.f32.mrf.mxu0
    %v677 = vadd.f32 0.0, %v676
    %v678 = vpop.f32.mrf.mxu0
    %v679 = vadd.f32 0.0, %v678
    %v680 = vpop.f32.mrf.mxu0
    %v681 = vadd.f32 0.0, %v680
    %v682 = vpop.f32.mrf.mxu0
    %v683 = vadd.f32 0.0, %v682
    %684 = vmatprep.mubr.bf16.mxu0 0
    %685 = vmatmul.mubr.bf16.gmra.mxu0 %v415
    %v686 = vpop.f32.mrf.mxu0
    %v687 = vadd.f32 0.0, %v686
    %v688 = vpop.f32.mrf.mxu0
    %v689 = vadd.f32 0.0, %v688
    %v690 = vpop.f32.mrf.mxu0
    %v691 = vadd.f32 0.0, %v690
    %v692 = vpop.f32.mrf.mxu0
    %v693 = vadd.f32 0.0, %v692
    %694 = vmatprep.mubr.bf16.mxu0 0
    %695 = vmatmul.mubr.bf16.gmra.mxu0 %v418
    %v696 = vpop.f32.mrf.mxu0
    %v697 = vadd.f32 0.0, %v696
    %v698 = vpop.f32.mrf.mxu0
    %v699 = vadd.f32 0.0, %v698
    %v700 = vpop.f32.mrf.mxu0
    %v701 = vadd.f32 0.0, %v700
    %v702 = vpop.f32.mrf.mxu0
    %v703 = vadd.f32 0.0, %v702
    %704 = vmatprep.mubr.bf16.mxu0 0
    %705 = vmatmul.mubr.bf16.gmra.mxu0 %v421
    %v706 = vpop.f32.mrf.mxu0
    %v707 = vadd.f32 0.0, %v706
    %v708 = vpop.f32.mrf.mxu0
    %v709 = vadd.f32 0.0, %v708
    %v710 = vpop.f32.mrf.mxu0
    %v711 = vadd.f32 0.0, %v710
    %v712 = vpop.f32.mrf.mxu0
    %v713 = vadd.f32 0.0, %v712
    %714 = vmatprep.mubr.bf16.mxu0 0
    %715 = vmatmul.mubr.bf16.gmra.mxu0 %v424
    %v716 = vpop.f32.mrf.mxu0
    %v717 = vadd.f32 0.0, %v716
    %v718 = vpop.f32.mrf.mxu0
    %v719 = vadd.f32 0.0, %v718
    %v720 = vpop.f32.mrf.mxu0
    %v721 = vadd.f32 0.0, %v720
    %v722 = vpop.f32.mrf.mxu0
    %v723 = vadd.f32 0.0, %v722
    %724 = vmatprep.mubr.bf16.mxu0 0
    %725 = vmatmul.mubr.bf16.gmra.mxu0 %v427
    %v726 = vpop.f32.mrf.mxu0
    %v727 = vadd.f32 0.0, %v726
    %v728 = vpop.f32.mrf.mxu0
    %v729 = vadd.f32 0.0, %v728
    %v730 = vpop.f32.mrf.mxu0
    %v731 = vadd.f32 0.0, %v730
    %v732 = vpop.f32.mrf.mxu0
    %v733 = vadd.f32 0.0, %v732
    %734 = vmatprep.mubr.bf16.mxu0 0
    %735 = vmatmul.mubr.bf16.gmra.mxu0 %v430
    %v736 = vpop.f32.mrf.mxu0
    %v737 = vadd.f32 0.0, %v736
    %v738 = vpop.f32.mrf.mxu0
    %v739 = vadd.f32 0.0, %v738
    %v740 = vpop.f32.mrf.mxu0
    %v741 = vadd.f32 0.0, %v740
    %v742 = vpop.f32.mrf.mxu0
    %v743 = vadd.f32 0.0, %v742
    %744 = vmatprep.mubr.bf16.mxu0 0
    %745 = vmatmul.mubr.bf16.gmra.mxu0 %v433
    %v746 = vpop.f32.mrf.mxu0
    %v747 = vadd.f32 0.0, %v746
    %v748 = vpop.f32.mrf.mxu0
    %v749 = vadd.f32 0.0, %v748
    %v750 = vpop.f32.mrf.mxu0
    %v751 = vadd.f32 0.0, %v750
    %v752 = vpop.f32.mrf.mxu0
    %v753 = vadd.f32 0.0, %v752
    %754 = vmatprep.mubr.bf16.mxu0 0
    %755 = vmatmul.mubr.bf16.gmra.mxu0 %v436
    %v756 = vpop.f32.mrf.mxu0
    %v757 = vadd.f32 0.0, %v756
    %v758 = vpop.f32.mrf.mxu0
    %v759 = vadd.f32 0.0, %v758
    %v760 = vpop.f32.mrf.mxu0
    %v761 = vadd.f32 0.0, %v760
    %v762 = vpop.f32.mrf.mxu0
    %v763 = vadd.f32 0.0, %v762
    %764 = vmatprep.mubr.bf16.mxu0 0
    %765 = vmatmul.mubr.bf16.gmra.mxu0 %v439
    %v766 = vpop.f32.mrf.mxu0
    %v767 = vadd.f32 0.0, %v766
    %v768 = vpop.f32.mrf.mxu0
    %v769 = vadd.f32 0.0, %v768
    %v770 = vpop.f32.mrf.mxu0
    %v771 = vadd.f32 0.0, %v770
    %v772 = vpop.f32.mrf.mxu0
    %v773 = vadd.f32 0.0, %v772
    %774 = vmatprep.mubr.bf16.mxu0 0
    %775 = vmatmul.mubr.bf16.gmra.mxu0 %v624
    %v776 = vpop.f32.mrf.mxu0
    %v777 = vadd.f32 0.0, %v776
    %v778 = vpop.f32.mrf.mxu0
    %v779 = vadd.f32 0.0, %v778
    %v780 = vpop.f32.mrf.mxu0
    %v781 = vadd.f32 0.0, %v780
    %v782 = vpop.f32.mrf.mxu0
    %v783 = vadd.f32 0.0, %v782
    %784 = vdwg.mxu0
    %v785 = vadd.f32 %v482, %v667
    %v786 = vadd.f32 %v484, %v669
    %v787 = vadd.f32 %v486, %v671
    %v788 = vadd.f32 %v488, %v673
    %v789 = vadd.f32 %v492, %v677
    %v790 = vadd.f32 %v494, %v679
    %v791 = vadd.f32 %v496, %v681
    %v792 = vadd.f32 %v498, %v683
    %v793 = vadd.f32 %v502, %v687
    %v794 = vadd.f32 %v504, %v689
    %v795 = vadd.f32 %v506, %v691
    %v796 = vadd.f32 %v508, %v693
    %v797 = vadd.f32 %v512, %v697
    %v798 = vadd.f32 %v514, %v699
    %v799 = vadd.f32 %v516, %v701
    %v800 = vadd.f32 %v518, %v703
    %v801 = vadd.f32 %v522, %v707
    %v802 = vadd.f32 %v524, %v709
    %v803 = vadd.f32 %v526, %v711
    %v804 = vadd.f32 %v528, %v713
    %v805 = vadd.f32 %v532, %v717
    %v806 = vadd.f32 %v534, %v719
    %v807 = vadd.f32 %v536, %v721
    %v808 = vadd.f32 %v538, %v723
    %v809 = vadd.f32 %v542, %v727
    %v810 = vadd.f32 %v544, %v729
    %v811 = vadd.f32 %v546, %v731
    %v812 = vadd.f32 %v548, %v733
    %v813 = vadd.f32 %v552, %v737
    %v814 = vadd.f32 %v554, %v739
    %v815 = vadd.f32 %v556, %v741
    %v816 = vadd.f32 %v558, %v743
    %v817 = vadd.f32 %v562, %v747
    %v818 = vadd.f32 %v564, %v749
    %v819 = vadd.f32 %v566, %v751
    %v820 = vadd.f32 %v568, %v753
    %v821 = vadd.f32 %v572, %v757
    %v822 = vadd.f32 %v574, %v759
    %v823 = vadd.f32 %v576, %v761
    %v824 = vadd.f32 %v578, %v763
    %v825 = vadd.f32 %v582, %v767
    %v826 = vadd.f32 %v584, %v769
    %v827 = vadd.f32 %v586, %v771
    %v828 = vadd.f32 %v588, %v773
    %v829 = vadd.f32 %v592, %v777
    %v830 = vadd.f32 %v594, %v779
    %v831 = vadd.f32 %v596, %v781
    %v832 = vadd.f32 %v598, %v783
    %s833 = scalar_lea.vmem [#allocation2], 96
    %v834 = vld [vmem:[%s833] sm:$0xff]
    %v835 = vld [vmem:[%s833 + $0x8] sm:$0xff]
    %v836 = vld [vmem:[%s833 + $0x10] sm:$0xff]
    %v837 = vld [vmem:[%s833 + $0x18] sm:$0x33]
    %v839 = vrot.slane %v123, 4
    %v840 = vsel %vm146, %v170, %v839
    %v845 = vunpack.c.l.b16 %v834
    %v846 = vunpack.c.h.b16 %v834
    %v847 = vunpack.c.l.b16 %v835
    %v848 = vunpack.c.h.b16 %v835
    %v849 = vunpack.c.l.b16 %v836
    %v850 = vunpack.c.h.b16 %v836
    %v851 = vunpack.c.l.b16 %v837
    %v852 = vunpack.c.h.b16 %v837
    %v853 = vpack.c.b16 %v847, %v845
    %v854 = vpack.c.b16 %v848, %v846
    %v855 = vpack.c.b16 %v851, %v849
    %v856 = vpack.c.b16 %v852, %v850
    %v860 = vsel %vm190, %v840, 0
    %v863 = vsel %vm227, %v855, 0
    %v866 = vsel %vm227, %v856, 0
    %868 = vmatprep.subr.bf16.mxu0 0
    %869 = vmatpush1.bf16.msra.mxu0 0
    %870 = vmatprep.subr.bf16.mxu0 0
    %871 = vmatpush1.bf16.msra.mxu0 0
    %872 = vmatprep.subr.bf16.mxu0 0
    %873 = vmatpush1.bf16.msra.mxu0 0
    %874 = vmatprep.subr.bf16.mxu0 0
    %875 = vmatpush1.bf16.msra.mxu0 0
    %876 = vmatprep.subr.bf16.mxu0 0
    %877 = vmatpush1.bf16.msra.mxu0 0
    %878 = vmatprep.subr.bf16.mxu0 0
    %879 = vmatpush1.bf16.msra.mxu0 0
    %880 = vmatprep.subr.bf16.mxu0 %v866
    %881 = vmatpush1.bf16.msra.mxu0 %v863
    %882 = vmatprep.subr.bf16.mxu0 %v854
    %883 = vmatpush1.bf16.msra.mxu0 %v853
    %884 = vmatprep.subr.bf16.mxu0 0
    %885 = vmatpush2.bf16.msra.mxu0 0
    %886 = vmatprep.subr.bf16.mxu0 0
    %887 = vmatpush2.bf16.msra.mxu0 0
    %888 = vmatprep.subr.bf16.mxu0 0
    %889 = vmatpush2.bf16.msra.mxu0 0
    %890 = vmatprep.subr.bf16.mxu0 0
    %891 = vmatpush2.bf16.msra.mxu0 0
    %892 = vmatprep.subr.bf16.mxu0 0
    %893 = vmatpush2.bf16.msra.mxu0 0
    %894 = vmatprep.subr.bf16.mxu0 0
    %895 = vmatpush2.bf16.msra.mxu0 0
    %896 = vmatprep.subr.bf16.mxu0 0
    %897 = vmatpush2.bf16.msra.mxu0 0
    %898 = vmatprep.subr.bf16.mxu0 0
    %899 = vmatpush2.bf16.msra.mxu0 0
    %900 = vmatprep.mubr.bf16.mxu0 0
    %901 = vmatmul.mubr.bf16.gmra.mxu0 %v195
    %v902 = vpop.f32.mrf.mxu0
    %v903 = vadd.f32 0.0, %v902
    %v904 = vpop.f32.mrf.mxu0
    %v905 = vadd.f32 0.0, %v904
    %v906 = vpop.f32.mrf.mxu0
    %v907 = vadd.f32 0.0, %v906
    %v908 = vpop.f32.mrf.mxu0
    %v909 = vadd.f32 0.0, %v908
    %910 = vmatprep.mubr.bf16.mxu0 0
    %911 = vmatmul.mubr.bf16.gmra.mxu0 %v198
    %v912 = vpop.f32.mrf.mxu0
    %v913 = vadd.f32 0.0, %v912
    %v914 = vpop.f32.mrf.mxu0
    %v915 = vadd.f32 0.0, %v914
    %v916 = vpop.f32.mrf.mxu0
    %v917 = vadd.f32 0.0, %v916
    %v918 = vpop.f32.mrf.mxu0
    %v919 = vadd.f32 0.0, %v918
    %920 = vmatprep.mubr.bf16.mxu0 0
    %921 = vmatmul.mubr.bf16.gmra.mxu0 %v201
    %v922 = vpop.f32.mrf.mxu0
    %v923 = vadd.f32 0.0, %v922
    %v924 = vpop.f32.mrf.mxu0
    %v925 = vadd.f32 0.0, %v924
    %v926 = vpop.f32.mrf.mxu0
    %v927 = vadd.f32 0.0, %v926
    %v928 = vpop.f32.mrf.mxu0
    %v929 = vadd.f32 0.0, %v928
    %930 = vmatprep.mubr.bf16.mxu0 0
    %931 = vmatmul.mubr.bf16.gmra.mxu0 %v204
    %v932 = vpop.f32.mrf.mxu0
    %v933 = vadd.f32 0.0, %v932
    %v934 = vpop.f32.mrf.mxu0
    %v935 = vadd.f32 0.0, %v934
    %v936 = vpop.f32.mrf.mxu0
    %v937 = vadd.f32 0.0, %v936
    %v938 = vpop.f32.mrf.mxu0
    %v939 = vadd.f32 0.0, %v938
    %940 = vmatprep.mubr.bf16.mxu0 0
    %941 = vmatmul.mubr.bf16.gmra.mxu0 %v207
    %v942 = vpop.f32.mrf.mxu0
    %v943 = vadd.f32 0.0, %v942
    %v944 = vpop.f32.mrf.mxu0
    %v945 = vadd.f32 0.0, %v944
    %v946 = vpop.f32.mrf.mxu0
    %v947 = vadd.f32 0.0, %v946
    %v948 = vpop.f32.mrf.mxu0
    %v949 = vadd.f32 0.0, %v948
    %950 = vmatprep.mubr.bf16.mxu0 0
    %951 = vmatmul.mubr.bf16.gmra.mxu0 %v210
    %v952 = vpop.f32.mrf.mxu0
    %v953 = vadd.f32 0.0, %v952
    %v954 = vpop.f32.mrf.mxu0
    %v955 = vadd.f32 0.0, %v954
    %v956 = vpop.f32.mrf.mxu0
    %v957 = vadd.f32 0.0, %v956
    %v958 = vpop.f32.mrf.mxu0
    %v959 = vadd.f32 0.0, %v958
    %960 = vmatprep.mubr.bf16.mxu0 0
    %961 = vmatmul.mubr.bf16.gmra.mxu0 %v213
    %v962 = vpop.f32.mrf.mxu0
    %v963 = vadd.f32 0.0, %v962
    %v964 = vpop.f32.mrf.mxu0
    %v965 = vadd.f32 0.0, %v964
    %v966 = vpop.f32.mrf.mxu0
    %v967 = vadd.f32 0.0, %v966
    %v968 = vpop.f32.mrf.mxu0
    %v969 = vadd.f32 0.0, %v968
    %970 = vmatprep.mubr.bf16.mxu0 0
    %971 = vmatmul.mubr.bf16.gmra.mxu0 %v216
    %v972 = vpop.f32.mrf.mxu0
    %v973 = vadd.f32 0.0, %v972
    %v974 = vpop.f32.mrf.mxu0
    %v975 = vadd.f32 0.0, %v974
    %v976 = vpop.f32.mrf.mxu0
    %v977 = vadd.f32 0.0, %v976
    %v978 = vpop.f32.mrf.mxu0
    %v979 = vadd.f32 0.0, %v978
    %980 = vmatprep.mubr.bf16.mxu0 0
    %981 = vmatmul.mubr.bf16.gmra.mxu0 %v219
    %v982 = vpop.f32.mrf.mxu0
    %v983 = vadd.f32 0.0, %v982
    %v984 = vpop.f32.mrf.mxu0
    %v985 = vadd.f32 0.0, %v984
    %v986 = vpop.f32.mrf.mxu0
    %v987 = vadd.f32 0.0, %v986
    %v988 = vpop.f32.mrf.mxu0
    %v989 = vadd.f32 0.0, %v988
    %990 = vmatprep.mubr.bf16.mxu0 0
    %991 = vmatmul.mubr.bf16.gmra.mxu0 %v222
    %v992 = vpop.f32.mrf.mxu0
    %v993 = vadd.f32 0.0, %v992
    %v994 = vpop.f32.mrf.mxu0
    %v995 = vadd.f32 0.0, %v994
    %v996 = vpop.f32.mrf.mxu0
    %v997 = vadd.f32 0.0, %v996
    %v998 = vpop.f32.mrf.mxu0
    %v999 = vadd.f32 0.0, %v998
    %1000 = vmatprep.mubr.bf16.mxu0 0
    %1001 = vmatmul.mubr.bf16.gmra.mxu0 %v225
    %v1002 = vpop.f32.mrf.mxu0
    %v1003 = vadd.f32 0.0, %v1002
    %v1004 = vpop.f32.mrf.mxu0
    %v1005 = vadd.f32 0.0, %v1004
    %v1006 = vpop.f32.mrf.mxu0
    %v1007 = vadd.f32 0.0, %v1006
    %v1008 = vpop.f32.mrf.mxu0
    %v1009 = vadd.f32 0.0, %v1008
    %1010 = vmatprep.mubr.bf16.mxu0 0
    %1011 = vmatmul.mubr.bf16.gmra.mxu0 %v860
    %v1012 = vpop.f32.mrf.mxu0
    %v1013 = vadd.f32 0.0, %v1012
    %v1014 = vpop.f32.mrf.mxu0
    %v1015 = vadd.f32 0.0, %v1014
    %v1016 = vpop.f32.mrf.mxu0
    %v1017 = vadd.f32 0.0, %v1016
    %v1018 = vpop.f32.mrf.mxu0
    %v1019 = vadd.f32 0.0, %v1018
    %1020 = vdwg.mxu0
    %v1021 = vadd.f32 %v785, %v903
    %v1022 = vadd.f32 %v786, %v905
    %v1023 = vadd.f32 %v787, %v907
    %v1024 = vadd.f32 %v788, %v909
    %v1025 = vadd.f32 %v789, %v913
    %v1026 = vadd.f32 %v790, %v915
    %v1027 = vadd.f32 %v791, %v917
    %v1028 = vadd.f32 %v792, %v919
    %v1029 = vadd.f32 %v793, %v923
    %v1030 = vadd.f32 %v794, %v925
    %v1031 = vadd.f32 %v795, %v927
    %v1032 = vadd.f32 %v796, %v929
    %v1033 = vadd.f32 %v797, %v933
    %v1034 = vadd.f32 %v798, %v935
    %v1035 = vadd.f32 %v799, %v937
    %v1036 = vadd.f32 %v800, %v939
    %v1037 = vadd.f32 %v801, %v943
    %v1038 = vadd.f32 %v802, %v945
    %v1039 = vadd.f32 %v803, %v947
    %v1040 = vadd.f32 %v804, %v949
    %v1041 = vadd.f32 %v805, %v953
    %v1042 = vadd.f32 %v806, %v955
    %v1043 = vadd.f32 %v807, %v957
    %v1044 = vadd.f32 %v808, %v959
    %v1045 = vadd.f32 %v809, %v963
    %v1046 = vadd.f32 %v810, %v965
    %v1047 = vadd.f32 %v811, %v967
    %v1048 = vadd.f32 %v812, %v969
    %v1049 = vadd.f32 %v813, %v973
    %v1050 = vadd.f32 %v814, %v975
    %v1051 = vadd.f32 %v815, %v977
    %v1052 = vadd.f32 %v816, %v979
    %v1053 = vadd.f32 %v817, %v983
    %v1054 = vadd.f32 %v818, %v985
    %v1055 = vadd.f32 %v819, %v987
    %v1056 = vadd.f32 %v820, %v989
    %v1057 = vadd.f32 %v821, %v993
    %v1058 = vadd.f32 %v822, %v995
    %v1059 = vadd.f32 %v823, %v997
    %v1060 = vadd.f32 %v824, %v999
    %v1061 = vadd.f32 %v825, %v1003
    %v1062 = vadd.f32 %v826, %v1005
    %v1063 = vadd.f32 %v827, %v1007
    %v1064 = vadd.f32 %v828, %v1009
    %v1065 = vadd.f32 %v829, %v1013
    %v1066 = vadd.f32 %v830, %v1015
    %v1067 = vadd.f32 %v831, %v1017
    %v1068 = vadd.f32 %v832, %v1019
    %s1069 = scalar_lea.vmem [#allocation2], 128
    %v1070 = vld [vmem:[%s1069] sm:$0xff]
    %v1071 = vld [vmem:[%s1069 + $0x8] sm:$0xff]
    %v1072 = vld [vmem:[%s1069 + $0x10] sm:$0xff]
    %v1073 = vld [vmem:[%s1069 + $0x18] sm:$0x33]
    %v1078 = vunpack.c.l.b16 %v1070
    %v1079 = vunpack.c.h.b16 %v1070
    %v1080 = vunpack.c.l.b16 %v1071
    %v1081 = vunpack.c.h.b16 %v1071
    %v1082 = vunpack.c.l.b16 %v1072
    %v1083 = vunpack.c.h.b16 %v1072
    %v1084 = vunpack.c.l.b16 %v1073
    %v1085 = vunpack.c.h.b16 %v1073
    %v1086 = vpack.c.b16 %v1080, %v1078
    %v1087 = vpack.c.b16 %v1081, %v1079
    %v1088 = vpack.c.b16 %v1084, %v1082
    %v1089 = vpack.c.b16 %v1085, %v1083
    %v1093 = vsel %vm190, %v123, 0
    %v1096 = vsel %vm227, %v1088, 0
    %v1099 = vsel %vm227, %v1089, 0
    %1101 = vmatprep.subr.bf16.mxu0 0
    %1102 = vmatpush1.bf16.msra.mxu0 0
    %1103 = vmatprep.subr.bf16.mxu0 0
    %1104 = vmatpush1.bf16.msra.mxu0 0
    %1105 = vmatprep.subr.bf16.mxu0 0
    %1106 = vmatpush1.bf16.msra.mxu0 0
    %1107 = vmatprep.subr.bf16.mxu0 0
    %1108 = vmatpush1.bf16.msra.mxu0 0
    %1109 = vmatprep.subr.bf16.mxu0 0
    %1110 = vmatpush1.bf16.msra.mxu0 0
    %1111 = vmatprep.subr.bf16.mxu0 0
    %1112 = vmatpush1.bf16.msra.mxu0 0
    %1113 = vmatprep.subr.bf16.mxu0 %v1099
    %1114 = vmatpush1.bf16.msra.mxu0 %v1096
    %1115 = vmatprep.subr.bf16.mxu0 %v1087
    %1116 = vmatpush1.bf16.msra.mxu0 %v1086
    %1117 = vmatprep.subr.bf16.mxu0 0
    %1118 = vmatpush2.bf16.msra.mxu0 0
    %1119 = vmatprep.subr.bf16.mxu0 0
    %1120 = vmatpush2.bf16.msra.mxu0 0
    %1121 = vmatprep.subr.bf16.mxu0 0
    %1122 = vmatpush2.bf16.msra.mxu0 0
    %1123 = vmatprep.subr.bf16.mxu0 0
    %1124 = vmatpush2.bf16.msra.mxu0 0
    %1125 = vmatprep.subr.bf16.mxu0 0
    %1126 = vmatpush2.bf16.msra.mxu0 0
    %1127 = vmatprep.subr.bf16.mxu0 0
    %1128 = vmatpush2.bf16.msra.mxu0 0
    %1129 = vmatprep.subr.bf16.mxu0 0
    %1130 = vmatpush2.bf16.msra.mxu0 0
    %1131 = vmatprep.subr.bf16.mxu0 0
    %1132 = vmatpush2.bf16.msra.mxu0 0
    %1133 = vmatprep.mubr.bf16.mxu0 0
    %1134 = vmatmul.mubr.bf16.gmra.mxu0 %v412
    %v1135 = vpop.f32.mrf.mxu0
    %v1136 = vadd.f32 0.0, %v1135
    %v1137 = vpop.f32.mrf.mxu0
    %v1138 = vadd.f32 0.0, %v1137
    %v1139 = vpop.f32.mrf.mxu0
    %v1140 = vadd.f32 0.0, %v1139
    %v1141 = vpop.f32.mrf.mxu0
    %v1142 = vadd.f32 0.0, %v1141
    %1143 = vmatprep.mubr.bf16.mxu0 0
    %1144 = vmatmul.mubr.bf16.gmra.mxu0 %v415
    %v1145 = vpop.f32.mrf.mxu0
    %v1146 = vadd.f32 0.0, %v1145
    %v1147 = vpop.f32.mrf.mxu0
    %v1148 = vadd.f32 0.0, %v1147
    %v1149 = vpop.f32.mrf.mxu0
    %v1150 = vadd.f32 0.0, %v1149
    %v1151 = vpop.f32.mrf.mxu0
    %v1152 = vadd.f32 0.0, %v1151
    %1153 = vmatprep.mubr.bf16.mxu0 0
    %1154 = vmatmul.mubr.bf16.gmra.mxu0 %v418
    %v1155 = vpop.f32.mrf.mxu0
    %v1156 = vadd.f32 0.0, %v1155
    %v1157 = vpop.f32.mrf.mxu0
    %v1158 = vadd.f32 0.0, %v1157
    %v1159 = vpop.f32.mrf.mxu0
    %v1160 = vadd.f32 0.0, %v1159
    %v1161 = vpop.f32.mrf.mxu0
    %v1162 = vadd.f32 0.0, %v1161
    %1163 = vmatprep.mubr.bf16.mxu0 0
    %1164 = vmatmul.mubr.bf16.gmra.mxu0 %v421
    %v1165 = vpop.f32.mrf.mxu0
    %v1166 = vadd.f32 0.0, %v1165
    %v1167 = vpop.f32.mrf.mxu0
    %v1168 = vadd.f32 0.0, %v1167
    %v1169 = vpop.f32.mrf.mxu0
    %v1170 = vadd.f32 0.0, %v1169
    %v1171 = vpop.f32.mrf.mxu0
    %v1172 = vadd.f32 0.0, %v1171
    %1173 = vmatprep.mubr.bf16.mxu0 0
    %1174 = vmatmul.mubr.bf16.gmra.mxu0 %v424
    %v1175 = vpop.f32.mrf.mxu0
    %v1176 = vadd.f32 0.0, %v1175
    %v1177 = vpop.f32.mrf.mxu0
    %v1178 = vadd.f32 0.0, %v1177
    %v1179 = vpop.f32.mrf.mxu0
    %v1180 = vadd.f32 0.0, %v1179
    %v1181 = vpop.f32.mrf.mxu0
    %v1182 = vadd.f32 0.0, %v1181
    %1183 = vmatprep.mubr.bf16.mxu0 0
    %1184 = vmatmul.mubr.bf16.gmra.mxu0 %v427
    %v1185 = vpop.f32.mrf.mxu0
    %v1186 = vadd.f32 0.0, %v1185
    %v1187 = vpop.f32.mrf.mxu0
    %v1188 = vadd.f32 0.0, %v1187
    %v1189 = vpop.f32.mrf.mxu0
    %v1190 = vadd.f32 0.0, %v1189
    %v1191 = vpop.f32.mrf.mxu0
    %v1192 = vadd.f32 0.0, %v1191
    %1193 = vmatprep.mubr.bf16.mxu0 0
    %1194 = vmatmul.mubr.bf16.gmra.mxu0 %v430
    %v1195 = vpop.f32.mrf.mxu0
    %v1196 = vadd.f32 0.0, %v1195
    %v1197 = vpop.f32.mrf.mxu0
    %v1198 = vadd.f32 0.0, %v1197
    %v1199 = vpop.f32.mrf.mxu0
    %v1200 = vadd.f32 0.0, %v1199
    %v1201 = vpop.f32.mrf.mxu0
    %v1202 = vadd.f32 0.0, %v1201
    %1203 = vmatprep.mubr.bf16.mxu0 0
    %1204 = vmatmul.mubr.bf16.gmra.mxu0 %v433
    %v1205 = vpop.f32.mrf.mxu0
    %v1206 = vadd.f32 0.0, %v1205
    %v1207 = vpop.f32.mrf.mxu0
    %v1208 = vadd.f32 0.0, %v1207
    %v1209 = vpop.f32.mrf.mxu0
    %v1210 = vadd.f32 0.0, %v1209
    %v1211 = vpop.f32.mrf.mxu0
    %v1212 = vadd.f32 0.0, %v1211
    %1213 = vmatprep.mubr.bf16.mxu0 0
    %1214 = vmatmul.mubr.bf16.gmra.mxu0 %v436
    %v1215 = vpop.f32.mrf.mxu0
    %v1216 = vadd.f32 0.0, %v1215
    %v1217 = vpop.f32.mrf.mxu0
    %v1218 = vadd.f32 0.0, %v1217
    %v1219 = vpop.f32.mrf.mxu0
    %v1220 = vadd.f32 0.0, %v1219
    %v1221 = vpop.f32.mrf.mxu0
    %v1222 = vadd.f32 0.0, %v1221
    %1223 = vmatprep.mubr.bf16.mxu0 0
    %1224 = vmatmul.mubr.bf16.gmra.mxu0 %v439
    %v1225 = vpop.f32.mrf.mxu0
    %v1226 = vadd.f32 0.0, %v1225
    %v1227 = vpop.f32.mrf.mxu0
    %v1228 = vadd.f32 0.0, %v1227
    %v1229 = vpop.f32.mrf.mxu0
    %v1230 = vadd.f32 0.0, %v1229
    %v1231 = vpop.f32.mrf.mxu0
    %v1232 = vadd.f32 0.0, %v1231
    %1233 = vmatprep.mubr.bf16.mxu0 0
    %1234 = vmatmul.mubr.bf16.gmra.mxu0 %v624
    %v1235 = vpop.f32.mrf.mxu0
    %v1236 = vadd.f32 0.0, %v1235
    %v1237 = vpop.f32.mrf.mxu0
    %v1238 = vadd.f32 0.0, %v1237
    %v1239 = vpop.f32.mrf.mxu0
    %v1240 = vadd.f32 0.0, %v1239
    %v1241 = vpop.f32.mrf.mxu0
    %v1242 = vadd.f32 0.0, %v1241
    %1243 = vmatprep.mubr.bf16.mxu0 0
    %1244 = vmatmul.mubr.bf16.gmra.mxu0 %v1093
    %v1245 = vpop.f32.mrf.mxu0
    %v1246 = vadd.f32 0.0, %v1245
    %v1247 = vpop.f32.mrf.mxu0
    %v1248 = vadd.f32 0.0, %v1247
    %v1249 = vpop.f32.mrf.mxu0
    %v1250 = vadd.f32 0.0, %v1249
    %v1251 = vpop.f32.mrf.mxu0
    %v1252 = vadd.f32 0.0, %v1251
    %1253 = vdwg.mxu0
    %v1254 = vadd.f32 %v1021, %v1136
    %v1255 = vadd.f32 %v1022, %v1138
    %v1256 = vadd.f32 %v1023, %v1140
    %v1257 = vadd.f32 %v1024, %v1142
    %v1258 = vadd.f32 %v1025, %v1146
    %v1259 = vadd.f32 %v1026, %v1148
    %v1260 = vadd.f32 %v1027, %v1150
    %v1261 = vadd.f32 %v1028, %v1152
    %v1262 = vadd.f32 %v1029, %v1156
    %v1263 = vadd.f32 %v1030, %v1158
    %v1264 = vadd.f32 %v1031, %v1160
    %v1265 = vadd.f32 %v1032, %v1162
    %v1266 = vadd.f32 %v1033, %v1166
    %v1267 = vadd.f32 %v1034, %v1168
    %v1268 = vadd.f32 %v1035, %v1170
    %v1269 = vadd.f32 %v1036, %v1172
    %v1270 = vadd.f32 %v1037, %v1176
    %v1271 = vadd.f32 %v1038, %v1178
    %v1272 = vadd.f32 %v1039, %v1180
    %v1273 = vadd.f32 %v1040, %v1182
    %v1274 = vadd.f32 %v1041, %v1186
    %v1275 = vadd.f32 %v1042, %v1188
    %v1276 = vadd.f32 %v1043, %v1190
    %v1277 = vadd.f32 %v1044, %v1192
    %v1278 = vadd.f32 %v1045, %v1196
    %v1279 = vadd.f32 %v1046, %v1198
    %v1280 = vadd.f32 %v1047, %v1200
    %v1281 = vadd.f32 %v1048, %v1202
    %v1282 = vadd.f32 %v1049, %v1206
    %v1283 = vadd.f32 %v1050, %v1208
    %v1284 = vadd.f32 %v1051, %v1210
    %v1285 = vadd.f32 %v1052, %v1212
    %v1286 = vadd.f32 %v1053, %v1216
    %v1287 = vadd.f32 %v1054, %v1218
    %v1288 = vadd.f32 %v1055, %v1220
    %v1289 = vadd.f32 %v1056, %v1222
    %v1290 = vadd.f32 %v1057, %v1226
    %v1291 = vadd.f32 %v1058, %v1228
    %v1292 = vadd.f32 %v1059, %v1230
    %v1293 = vadd.f32 %v1060, %v1232
    %v1294 = vadd.f32 %v1061, %v1236
    %v1295 = vadd.f32 %v1062, %v1238
    %v1296 = vadd.f32 %v1063, %v1240
    %v1297 = vadd.f32 %v1064, %v1242
    %v1298 = vadd.f32 %v1065, %v1246
    %v1299 = vadd.f32 %v1066, %v1248
    %v1300 = vadd.f32 %v1067, %v1250
    %v1301 = vadd.f32 %v1068, %v1252
    %v1302 = vld [vmem:[%s2] sm:$0x3]
    %v1304 = vlaneseq
    %v1305 = vshrl.u32 %v1304, 7
    %v1306 = vsub.s32 0, %v1305
    %v1307 = vrot.slane %v1302, %v1306
    %v1308 = vlaneseq
    %v1309 = vshrl.u32 %v1308, 7
    %v1310 = vsub.s32 1, %v1309
    %v1311 = vrot.slane %v1302, %v1310
    %v1314 = vadd.f32 %v1254, %v1307
    %v1315 = vadd.f32 %v1255, %v1311
    %v1316 = vadd.f32 %v1256, %v1307
    %v1317 = vadd.f32 %v1257, %v1311
    %v1318 = vadd.f32 %v1258, %v1307
    %v1319 = vadd.f32 %v1259, %v1311
    %v1320 = vadd.f32 %v1260, %v1307
    %v1321 = vadd.f32 %v1261, %v1311
    %v1322 = vadd.f32 %v1262, %v1307
    %v1323 = vadd.f32 %v1263, %v1311
    %v1324 = vadd.f32 %v1264, %v1307
    %v1325 = vadd.f32 %v1265, %v1311
    %v1326 = vadd.f32 %v1266, %v1307
    %v1327 = vadd.f32 %v1267, %v1311
    %v1328 = vadd.f32 %v1268, %v1307
    %v1329 = vadd.f32 %v1269, %v1311
    %v1330 = vadd.f32 %v1270, %v1307
    %v1331 = vadd.f32 %v1271, %v1311
    %v1332 = vadd.f32 %v1272, %v1307
    %v1333 = vadd.f32 %v1273, %v1311
    %v1334 = vadd.f32 %v1274, %v1307
    %v1335 = vadd.f32 %v1275, %v1311
    %v1336 = vadd.f32 %v1276, %v1307
    %v1337 = vadd.f32 %v1277, %v1311
    %v1338 = vadd.f32 %v1278, %v1307
    %v1339 = vadd.f32 %v1279, %v1311
    %v1340 = vadd.f32 %v1280, %v1307
    %v1341 = vadd.f32 %v1281, %v1311
    %v1342 = vadd.f32 %v1282, %v1307
    %v1343 = vadd.f32 %v1283, %v1311
    %v1344 = vadd.f32 %v1284, %v1307
    %v1345 = vadd.f32 %v1285, %v1311
    %v1346 = vadd.f32 %v1286, %v1307
    %v1347 = vadd.f32 %v1287, %v1311
    %v1348 = vadd.f32 %v1288, %v1307
    %v1349 = vadd.f32 %v1289, %v1311
    %v1350 = vadd.f32 %v1290, %v1307
    %v1351 = vadd.f32 %v1291, %v1311
    %v1352 = vadd.f32 %v1292, %v1307
    %v1353 = vadd.f32 %v1293, %v1311
    %v1354 = vadd.f32 %v1294, %v1307
    %v1355 = vadd.f32 %v1295, %v1311
    %v1356 = vadd.f32 %v1296, %v1307
    %v1357 = vadd.f32 %v1297, %v1311
    %v1358 = vadd.f32 %v1298, %v1307
    %v1359 = vadd.f32 %v1299, %v1311
    %v1360 = vadd.f32 %v1300, %v1307
    %v1361 = vadd.f32 %v1301, %v1311
    %v1362 = vmax.f32 %v1314, %v1316
    %v1363 = vmax.f32 %v1315, %v1317
    %v1364 = vmax.f32 %v1318, %v1320
    %v1365 = vmax.f32 %v1319, %v1321
    %v1366 = vmax.f32 %v1322, %v1324
    %v1367 = vmax.f32 %v1323, %v1325
    %v1368 = vmax.f32 %v1326, %v1328
    %v1369 = vmax.f32 %v1327, %v1329
    %v1370 = vmax.f32 %v1330, %v1332
    %v1371 = vmax.f32 %v1331, %v1333
    %v1372 = vmax.f32 %v1334, %v1336
    %v1373 = vmax.f32 %v1335, %v1337
    %v1374 = vmax.f32 %v1338, %v1340
    %v1375 = vmax.f32 %v1339, %v1341
    %v1376 = vmax.f32 %v1342, %v1344
    %v1377 = vmax.f32 %v1343, %v1345
    %v1378 = vmax.f32 %v1346, %v1348
    %v1379 = vmax.f32 %v1347, %v1349
    %v1380 = vmax.f32 %v1350, %v1352
    %v1381 = vmax.f32 %v1351, %v1353
    %v1382 = vmax.f32 %v1354, %v1356
    %v1383 = vmax.f32 %v1355, %v1357
    %v1384 = vmax.f32 %v1358, %v1360
    %v1385 = vmax.f32 %v1359, %v1361
    %v1386 = vmax.f32 %v1362, %v1363
    %v1387 = vmax.f32 %v1364, %v1365
    %v1388 = vmax.f32 %v1366, %v1367
    %v1389 = vmax.f32 %v1368, %v1369
    %v1390 = vmax.f32 %v1370, %v1371
    %v1391 = vmax.f32 %v1372, %v1373
    %v1392 = vmax.f32 %v1374, %v1375
    %v1393 = vmax.f32 %v1376, %v1377
    %v1394 = vmax.f32 %v1378, %v1379
    %v1395 = vmax.f32 %v1380, %v1381
    %v1396 = vmax.f32 %v1382, %v1383
    %v1397 = vmax.f32 %v1384, %v1385
    %v1398 = vmax.f32 %v1386, 0.0
    %v1399 = vmax.f32 %v1387, 0.0
    %v1400 = vmax.f32 %v1388, 0.0
    %v1401 = vmax.f32 %v1389, 0.0
    %v1402 = vmax.f32 %v1390, 0.0
    %v1403 = vmax.f32 %v1391, 0.0
    %v1404 = vmax.f32 %v1392, 0.0
    %v1405 = vmax.f32 %v1393, 0.0
    %v1406 = vmax.f32 %v1394, 0.0
    %v1407 = vmax.f32 %v1395, 0.0
    %v1408 = vmax.f32 %v1396, 0.0
    %v1409 = vmax.f32 %v1397, 0.0
    %v1410 = vpack.c.bf16 %v1399, %v1398
    %v1411 = vpack.c.bf16 %v1401, %v1400
    %v1412 = vpack.c.bf16 %v1403, %v1402
    %v1413 = vpack.c.bf16 %v1405, %v1404
    %v1414 = vpack.c.bf16 %v1407, %v1406
    %v1415 = vpack.c.bf16 %v1409, %v1408
    %v1416 = vld [vmem:[%s3] sm:$0xff]
    %v1417 = vld [vmem:[%s3 + $0x8] sm:$0xff]
    %v1418 = vld [vmem:[%s3 + $0x10] sm:$0xff]
    %v1419 = vld [vmem:[%s3 + $0x18] sm:$0xff]
    %v1420 = vld [vmem:[%s3 + $0x20] sm:$0xff]
    %v1421 = vld [vmem:[%s3 + $0x28] sm:$0xff]
    %v1422 = vld [vmem:[%s3 + $0x30] sm:$0xff]
    %v1423 = vld [vmem:[%s3 + $0x38] sm:$0xff]
    %v1424 = vld [vmem:[%s3 + $0x40] sm:$0xff]
    %v1425 = vld [vmem:[%s3 + $0x48] sm:$0xff]
    %v1426 = vld [vmem:[%s3 + $0x50] sm:$0xff]
    %v1427 = vld [vmem:[%s3 + $0x58] sm:$0xff]
    %v1428 = vld [vmem:[%s3 + $0x60] sm:$0xff]
    %v1429 = vld [vmem:[%s3 + $0x68] sm:$0xff]
    %v1430 = vld [vmem:[%s3 + $0x70] sm:$0xff]
    %v1431 = vld [vmem:[%s3 + $0x78] sm:$0xff]
    %s1432 = scalar_lea.vmem %s3, 128
    %v1433 = vld [vmem:[%s1432] sm:$0xff]
    %v1434 = vld [vmem:[%s1432 + $0x8] sm:$0xff]
    %v1435 = vld [vmem:[%s1432 + $0x10] sm:$0xff]
    %v1436 = vld [vmem:[%s1432 + $0x18] sm:$0xff]
    %v1437 = vld [vmem:[%s1432 + $0x20] sm:$0xff]
    %v1438 = vld [vmem:[%s1432 + $0x28] sm:$0xff]
    %v1439 = vld [vmem:[%s1432 + $0x30] sm:$0xff]
    %v1440 = vld [vmem:[%s1432 + $0x38] sm:$0xff]
    %v1441 = vld [vmem:[%s1432 + $0x40] sm:$0xff]
    %v1442 = vld [vmem:[%s1432 + $0x48] sm:$0xff]
    %v1443 = vld [vmem:[%s1432 + $0x50] sm:$0xff]
    %v1444 = vld [vmem:[%s1432 + $0x58] sm:$0xff]
    %v1445 = vld [vmem:[%s1432 + $0x60] sm:$0xff]
    %v1446 = vld [vmem:[%s1432 + $0x68] sm:$0xff]
    %v1447 = vld [vmem:[%s1432 + $0x70] sm:$0xff]
    %v1448 = vld [vmem:[%s1432 + $0x78] sm:$0xff]
    %v1454 = vrot.slane %v1410, 4
    %v1455 = vrot.slane %v1411, 4
    %v1456 = vsel %vm146, %v1454, %v1455
    %v1457 = vrot.slane %v1412, 4
    %v1458 = vsel %vm146, %v1455, %v1457
    %v1459 = vrot.slane %v1413, 4
    %v1460 = vsel %vm146, %v1457, %v1459
    %v1461 = vrot.slane %v1414, 4
    %v1462 = vsel %vm146, %v1459, %v1461
    %v1483 = vunpack.c.l.b16 %v1433
    %v1484 = vunpack.c.h.b16 %v1433
    %v1485 = vunpack.c.l.b16 %v1434
    %v1486 = vunpack.c.h.b16 %v1434
    %v1487 = vunpack.c.l.b16 %v1435
    %v1488 = vunpack.c.h.b16 %v1435
    %v1489 = vunpack.c.l.b16 %v1436
    %v1490 = vunpack.c.h.b16 %v1436
    %v1491 = vunpack.c.l.b16 %v1437
    %v1492 = vunpack.c.h.b16 %v1437
    %v1493 = vunpack.c.l.b16 %v1438
    %v1494 = vunpack.c.h.b16 %v1438
    %v1495 = vunpack.c.l.b16 %v1439
    %v1496 = vunpack.c.h.b16 %v1439
    %v1497 = vunpack.c.l.b16 %v1440
    %v1498 = vunpack.c.h.b16 %v1440
    %v1499 = vunpack.c.l.b16 %v1441
    %v1500 = vunpack.c.h.b16 %v1441
    %v1501 = vunpack.c.l.b16 %v1442
    %v1502 = vunpack.c.h.b16 %v1442
    %v1503 = vunpack.c.l.b16 %v1443
    %v1504 = vunpack.c.h.b16 %v1443
    %v1505 = vunpack.c.l.b16 %v1444
    %v1506 = vunpack.c.h.b16 %v1444
    %v1507 = vunpack.c.l.b16 %v1445
    %v1508 = vunpack.c.h.b16 %v1445
    %v1509 = vunpack.c.l.b16 %v1446
    %v1510 = vunpack.c.h.b16 %v1446
    %v1511 = vunpack.c.l.b16 %v1447
    %v1512 = vunpack.c.h.b16 %v1447
    %v1513 = vunpack.c.l.b16 %v1448
    %v1514 = vunpack.c.h.b16 %v1448
    %v1515 = vpack.c.b16 %v1485, %v1483
    %v1516 = vpack.c.b16 %v1486, %v1484
    %v1517 = vpack.c.b16 %v1489, %v1487
    %v1518 = vpack.c.b16 %v1490, %v1488
    %v1519 = vpack.c.b16 %v1493, %v1491
    %v1520 = vpack.c.b16 %v1494, %v1492
    %v1521 = vpack.c.b16 %v1497, %v1495
    %v1522 = vpack.c.b16 %v1498, %v1496
    %v1523 = vpack.c.b16 %v1501, %v1499
    %v1524 = vpack.c.b16 %v1502, %v1500
    %v1525 = vpack.c.b16 %v1505, %v1503
    %v1526 = vpack.c.b16 %v1506, %v1504
    %v1527 = vpack.c.b16 %v1509, %v1507
    %v1528 = vpack.c.b16 %v1510, %v1508
    %v1529 = vpack.c.b16 %v1513, %v1511
    %v1530 = vpack.c.b16 %v1514, %v1512
    %1547 = vmatprep.subr.bf16.mxu0 %v1530
    %1548 = vmatpush1.bf16.msra.mxu0 %v1529
    %1549 = vmatprep.subr.bf16.mxu0 %v1528
    %1550 = vmatpush1.bf16.msra.mxu0 %v1527
    %1551 = vmatprep.subr.bf16.mxu0 %v1526
    %1552 = vmatpush1.bf16.msra.mxu0 %v1525
    %1553 = vmatprep.subr.bf16.mxu0 %v1524
    %1554 = vmatpush1.bf16.msra.mxu0 %v1523
    %1555 = vmatprep.subr.bf16.mxu0 %v1522
    %1556 = vmatpush1.bf16.msra.mxu0 %v1521
    %1557 = vmatprep.subr.bf16.mxu0 %v1520
    %1558 = vmatpush1.bf16.msra.mxu0 %v1519
    %1559 = vmatprep.subr.bf16.mxu0 %v1518
    %1560 = vmatpush1.bf16.msra.mxu0 %v1517
    %1561 = vmatprep.subr.bf16.mxu0 %v1516
    %1562 = vmatpush1.bf16.msra.mxu0 %v1515
    %1563 = vmatprep.subr.bf16.mxu0 0
    %1564 = vmatpush2.bf16.msra.mxu0 0
    %1565 = vmatprep.subr.bf16.mxu0 0
    %1566 = vmatpush2.bf16.msra.mxu0 0
    %1567 = vmatprep.subr.bf16.mxu0 0
    %1568 = vmatpush2.bf16.msra.mxu0 0
    %1569 = vmatprep.subr.bf16.mxu0 0
    %1570 = vmatpush2.bf16.msra.mxu0 0
    %1571 = vmatprep.subr.bf16.mxu0 0
    %1572 = vmatpush2.bf16.msra.mxu0 0
    %1573 = vmatprep.subr.bf16.mxu0 0
    %1574 = vmatpush2.bf16.msra.mxu0 0
    %1575 = vmatprep.subr.bf16.mxu0 0
    %1576 = vmatpush2.bf16.msra.mxu0 0
    %1577 = vmatprep.subr.bf16.mxu0 0
    %1578 = vmatpush2.bf16.msra.mxu0 0
    %1579 = vmatprep.mubr.bf16.mxu0 0
    %1580 = vmatmul.mubr.bf16.gmra.mxu0 %v1456
    %v1581 = vpop.f32.mrf.mxu0
    %v1582 = vadd.f32 0.0, %v1581
    %v1583 = vpop.f32.mrf.mxu0
    %v1584 = vadd.f32 0.0, %v1583
    %v1585 = vpop.f32.mrf.mxu0
    %v1586 = vadd.f32 0.0, %v1585
    %v1587 = vpop.f32.mrf.mxu0
    %v1588 = vadd.f32 0.0, %v1587
    %1589 = vmatprep.mubr.bf16.mxu0 0
    %1590 = vmatmul.mubr.bf16.gmra.mxu0 %v1458
    %v1591 = vpop.f32.mrf.mxu0
    %v1592 = vadd.f32 0.0, %v1591
    %v1593 = vpop.f32.mrf.mxu0
    %v1594 = vadd.f32 0.0, %v1593
    %v1595 = vpop.f32.mrf.mxu0
    %v1596 = vadd.f32 0.0, %v1595
    %v1597 = vpop.f32.mrf.mxu0
    %v1598 = vadd.f32 0.0, %v1597
    %1599 = vmatprep.mubr.bf16.mxu0 0
    %1600 = vmatmul.mubr.bf16.gmra.mxu0 %v1460
    %v1601 = vpop.f32.mrf.mxu0
    %v1602 = vadd.f32 0.0, %v1601
    %v1603 = vpop.f32.mrf.mxu0
    %v1604 = vadd.f32 0.0, %v1603
    %v1605 = vpop.f32.mrf.mxu0
    %v1606 = vadd.f32 0.0, %v1605
    %v1607 = vpop.f32.mrf.mxu0
    %v1608 = vadd.f32 0.0, %v1607
    %1609 = vmatprep.mubr.bf16.mxu0 0
    %1610 = vmatmul.mubr.bf16.gmra.mxu0 %v1462
    %v1611 = vpop.f32.mrf.mxu0
    %v1612 = vadd.f32 0.0, %v1611
    %v1613 = vpop.f32.mrf.mxu0
    %v1614 = vadd.f32 0.0, %v1613
    %v1615 = vpop.f32.mrf.mxu0
    %v1616 = vadd.f32 0.0, %v1615
    %v1617 = vpop.f32.mrf.mxu0
    %v1618 = vadd.f32 0.0, %v1617
    %1619 = vdwg.mxu0
    %v1636 = vunpack.c.l.b16 %v1416
    %v1637 = vunpack.c.h.b16 %v1416
    %v1638 = vunpack.c.l.b16 %v1417
    %v1639 = vunpack.c.h.b16 %v1417
    %v1640 = vunpack.c.l.b16 %v1418
    %v1641 = vunpack.c.h.b16 %v1418
    %v1642 = vunpack.c.l.b16 %v1419
    %v1643 = vunpack.c.h.b16 %v1419
    %v1644 = vunpack.c.l.b16 %v1420
    %v1645 = vunpack.c.h.b16 %v1420
    %v1646 = vunpack.c.l.b16 %v1421
    %v1647 = vunpack.c.h.b16 %v1421
    %v1648 = vunpack.c.l.b16 %v1422
    %v1649 = vunpack.c.h.b16 %v1422
    %v1650 = vunpack.c.l.b16 %v1423
    %v1651 = vunpack.c.h.b16 %v1423
    %v1652 = vunpack.c.l.b16 %v1424
    %v1653 = vunpack.c.h.b16 %v1424
    %v1654 = vunpack.c.l.b16 %v1425
    %v1655 = vunpack.c.h.b16 %v1425
    %v1656 = vunpack.c.l.b16 %v1426
    %v1657 = vunpack.c.h.b16 %v1426
    %v1658 = vunpack.c.l.b16 %v1427
    %v1659 = vunpack.c.h.b16 %v1427
    %v1660 = vunpack.c.l.b16 %v1428
    %v1661 = vunpack.c.h.b16 %v1428
    %v1662 = vunpack.c.l.b16 %v1429
    %v1663 = vunpack.c.h.b16 %v1429
    %v1664 = vunpack.c.l.b16 %v1430
    %v1665 = vunpack.c.h.b16 %v1430
    %v1666 = vunpack.c.l.b16 %v1431
    %v1667 = vunpack.c.h.b16 %v1431
    %v1668 = vpack.c.b16 %v1638, %v1636
    %v1669 = vpack.c.b16 %v1639, %v1637
    %v1670 = vpack.c.b16 %v1642, %v1640
    %v1671 = vpack.c.b16 %v1643, %v1641
    %v1672 = vpack.c.b16 %v1646, %v1644
    %v1673 = vpack.c.b16 %v1647, %v1645
    %v1674 = vpack.c.b16 %v1650, %v1648
    %v1675 = vpack.c.b16 %v1651, %v1649
    %v1676 = vpack.c.b16 %v1654, %v1652
    %v1677 = vpack.c.b16 %v1655, %v1653
    %v1678 = vpack.c.b16 %v1658, %v1656
    %v1679 = vpack.c.b16 %v1659, %v1657
    %v1680 = vpack.c.b16 %v1662, %v1660
    %v1681 = vpack.c.b16 %v1663, %v1661
    %v1682 = vpack.c.b16 %v1666, %v1664
    %v1683 = vpack.c.b16 %v1667, %v1665
    %1700 = vmatprep.subr.bf16.mxu0 %v1683
    %1701 = vmatpush1.bf16.msra.mxu0 %v1682
    %1702 = vmatprep.subr.bf16.mxu0 %v1681
    %1703 = vmatpush1.bf16.msra.mxu0 %v1680
    %1704 = vmatprep.subr.bf16.mxu0 %v1679
    %1705 = vmatpush1.bf16.msra.mxu0 %v1678
    %1706 = vmatprep.subr.bf16.mxu0 %v1677
    %1707 = vmatpush1.bf16.msra.mxu0 %v1676
    %1708 = vmatprep.subr.bf16.mxu0 %v1675
    %1709 = vmatpush1.bf16.msra.mxu0 %v1674
    %1710 = vmatprep.subr.bf16.mxu0 %v1673
    %1711 = vmatpush1.bf16.msra.mxu0 %v1672
    %1712 = vmatprep.subr.bf16.mxu0 %v1671
    %1713 = vmatpush1.bf16.msra.mxu0 %v1670
    %1714 = vmatprep.subr.bf16.mxu0 %v1669
    %1715 = vmatpush1.bf16.msra.mxu0 %v1668
    %1716 = vmatprep.subr.bf16.mxu0 0
    %1717 = vmatpush2.bf16.msra.mxu0 0
    %1718 = vmatprep.subr.bf16.mxu0 0
    %1719 = vmatpush2.bf16.msra.mxu0 0
    %1720 = vmatprep.subr.bf16.mxu0 0
    %1721 = vmatpush2.bf16.msra.mxu0 0
    %1722 = vmatprep.subr.bf16.mxu0 0
    %1723 = vmatpush2.bf16.msra.mxu0 0
    %1724 = vmatprep.subr.bf16.mxu0 0
    %1725 = vmatpush2.bf16.msra.mxu0 0
    %1726 = vmatprep.subr.bf16.mxu0 0
    %1727 = vmatpush2.bf16.msra.mxu0 0
    %1728 = vmatprep.subr.bf16.mxu0 0
    %1729 = vmatpush2.bf16.msra.mxu0 0
    %1730 = vmatprep.subr.bf16.mxu0 0
    %1731 = vmatpush2.bf16.msra.mxu0 0
    %1732 = vmatprep.mubr.bf16.mxu0 0
    %1733 = vmatmul.mubr.bf16.gmra.mxu0 %v1410
    %v1734 = vpop.f32.mrf.mxu0
    %v1735 = vadd.f32 %v1582, %v1734
    %v1736 = vpop.f32.mrf.mxu0
    %v1737 = vadd.f32 %v1584, %v1736
    %v1738 = vpop.f32.mrf.mxu0
    %v1739 = vadd.f32 %v1586, %v1738
    %v1740 = vpop.f32.mrf.mxu0
    %v1741 = vadd.f32 %v1588, %v1740
    %1742 = vmatprep.mubr.bf16.mxu0 0
    %1743 = vmatmul.mubr.bf16.gmra.mxu0 %v1411
    %v1744 = vpop.f32.mrf.mxu0
    %v1745 = vadd.f32 %v1592, %v1744
    %v1746 = vpop.f32.mrf.mxu0
    %v1747 = vadd.f32 %v1594, %v1746
    %v1748 = vpop.f32.mrf.mxu0
    %v1749 = vadd.f32 %v1596, %v1748
    %v1750 = vpop.f32.mrf.mxu0
    %v1751 = vadd.f32 %v1598, %v1750
    %1752 = vmatprep.mubr.bf16.mxu0 0
    %1753 = vmatmul.mubr.bf16.gmra.mxu0 %v1412
    %v1754 = vpop.f32.mrf.mxu0
    %v1755 = vadd.f32 %v1602, %v1754
    %v1756 = vpop.f32.mrf.mxu0
    %v1757 = vadd.f32 %v1604, %v1756
    %v1758 = vpop.f32.mrf.mxu0
    %v1759 = vadd.f32 %v1606, %v1758
    %v1760 = vpop.f32.mrf.mxu0
    %v1761 = vadd.f32 %v1608, %v1760
    %1762 = vmatprep.mubr.bf16.mxu0 0
    %1763 = vmatmul.mubr.bf16.gmra.mxu0 %v1413
    %v1764 = vpop.f32.mrf.mxu0
    %v1765 = vadd.f32 %v1612, %v1764
    %v1766 = vpop.f32.mrf.mxu0
    %v1767 = vadd.f32 %v1614, %v1766
    %v1768 = vpop.f32.mrf.mxu0
    %v1769 = vadd.f32 %v1616, %v1768
    %v1770 = vpop.f32.mrf.mxu0
    %v1771 = vadd.f32 %v1618, %v1770
    %1772 = vdwg.mxu0
    %s1773 = scalar_lea.vmem %s3, 256
    %v1774 = vld [vmem:[%s1773] sm:$0xff]
    %v1775 = vld [vmem:[%s1773 + $0x8] sm:$0xff]
    %v1776 = vld [vmem:[%s1773 + $0x10] sm:$0xff]
    %v1777 = vld [vmem:[%s1773 + $0x18] sm:$0xff]
    %v1778 = vld [vmem:[%s1773 + $0x20] sm:$0xff]
    %v1779 = vld [vmem:[%s1773 + $0x28] sm:$0xff]
    %v1780 = vld [vmem:[%s1773 + $0x30] sm:$0xff]
    %v1781 = vld [vmem:[%s1773 + $0x38] sm:$0xff]
    %v1782 = vld [vmem:[%s1773 + $0x40] sm:$0xff]
    %v1783 = vld [vmem:[%s1773 + $0x48] sm:$0xff]
    %v1784 = vld [vmem:[%s1773 + $0x50] sm:$0xff]
    %v1785 = vld [vmem:[%s1773 + $0x58] sm:$0xff]
    %v1786 = vld [vmem:[%s1773 + $0x60] sm:$0xff]
    %v1787 = vld [vmem:[%s1773 + $0x68] sm:$0xff]
    %v1788 = vld [vmem:[%s1773 + $0x70] sm:$0xff]
    %v1789 = vld [vmem:[%s1773 + $0x78] sm:$0xff]
    %v1806 = vunpack.c.l.b16 %v1774
    %v1807 = vunpack.c.h.b16 %v1774
    %v1808 = vunpack.c.l.b16 %v1775
    %v1809 = vunpack.c.h.b16 %v1775
    %v1810 = vunpack.c.l.b16 %v1776
    %v1811 = vunpack.c.h.b16 %v1776
    %v1812 = vunpack.c.l.b16 %v1777
    %v1813 = vunpack.c.h.b16 %v1777
    %v1814 = vunpack.c.l.b16 %v1778
    %v1815 = vunpack.c.h.b16 %v1778
    %v1816 = vunpack.c.l.b16 %v1779
    %v1817 = vunpack.c.h.b16 %v1779
    %v1818 = vunpack.c.l.b16 %v1780
    %v1819 = vunpack.c.h.b16 %v1780
    %v1820 = vunpack.c.l.b16 %v1781
    %v1821 = vunpack.c.h.b16 %v1781
    %v1822 = vunpack.c.l.b16 %v1782
    %v1823 = vunpack.c.h.b16 %v1782
    %v1824 = vunpack.c.l.b16 %v1783
    %v1825 = vunpack.c.h.b16 %v1783
    %v1826 = vunpack.c.l.b16 %v1784
    %v1827 = vunpack.c.h.b16 %v1784
    %v1828 = vunpack.c.l.b16 %v1785
    %v1829 = vunpack.c.h.b16 %v1785
    %v1830 = vunpack.c.l.b16 %v1786
    %v1831 = vunpack.c.h.b16 %v1786
    %v1832 = vunpack.c.l.b16 %v1787
    %v1833 = vunpack.c.h.b16 %v1787
    %v1834 = vunpack.c.l.b16 %v1788
    %v1835 = vunpack.c.h.b16 %v1788
    %v1836 = vunpack.c.l.b16 %v1789
    %v1837 = vunpack.c.h.b16 %v1789
    %v1838 = vpack.c.b16 %v1808, %v1806
    %v1839 = vpack.c.b16 %v1809, %v1807
    %v1840 = vpack.c.b16 %v1812, %v1810
    %v1841 = vpack.c.b16 %v1813, %v1811
    %v1842 = vpack.c.b16 %v1816, %v1814
    %v1843 = vpack.c.b16 %v1817, %v1815
    %v1844 = vpack.c.b16 %v1820, %v1818
    %v1845 = vpack.c.b16 %v1821, %v1819
    %v1846 = vpack.c.b16 %v1824, %v1822
    %v1847 = vpack.c.b16 %v1825, %v1823
    %v1848 = vpack.c.b16 %v1828, %v1826
    %v1849 = vpack.c.b16 %v1829, %v1827
    %v1850 = vpack.c.b16 %v1832, %v1830
    %v1851 = vpack.c.b16 %v1833, %v1831
    %v1852 = vpack.c.b16 %v1836, %v1834
    %v1853 = vpack.c.b16 %v1837, %v1835
    %1870 = vmatprep.subr.bf16.mxu0 %v1853
    %1871 = vmatpush1.bf16.msra.mxu0 %v1852
    %1872 = vmatprep.subr.bf16.mxu0 %v1851
    %1873 = vmatpush1.bf16.msra.mxu0 %v1850
    %1874 = vmatprep.subr.bf16.mxu0 %v1849
    %1875 = vmatpush1.bf16.msra.mxu0 %v1848
    %1876 = vmatprep.subr.bf16.mxu0 %v1847
    %1877 = vmatpush1.bf16.msra.mxu0 %v1846
    %1878 = vmatprep.subr.bf16.mxu0 %v1845
    %1879 = vmatpush1.bf16.msra.mxu0 %v1844
    %1880 = vmatprep.subr.bf16.mxu0 %v1843
    %1881 = vmatpush1.bf16.msra.mxu0 %v1842
    %1882 = vmatprep.subr.bf16.mxu0 %v1841
    %1883 = vmatpush1.bf16.msra.mxu0 %v1840
    %1884 = vmatprep.subr.bf16.mxu0 %v1839
    %1885 = vmatpush1.bf16.msra.mxu0 %v1838
    %1886 = vmatprep.subr.bf16.mxu0 0
    %1887 = vmatpush2.bf16.msra.mxu0 0
    %1888 = vmatprep.subr.bf16.mxu0 0
    %1889 = vmatpush2.bf16.msra.mxu0 0
    %1890 = vmatprep.subr.bf16.mxu0 0
    %1891 = vmatpush2.bf16.msra.mxu0 0
    %1892 = vmatprep.subr.bf16.mxu0 0
    %1893 = vmatpush2.bf16.msra.mxu0 0
    %1894 = vmatprep.subr.bf16.mxu0 0
    %1895 = vmatpush2.bf16.msra.mxu0 0
    %1896 = vmatprep.subr.bf16.mxu0 0
    %1897 = vmatpush2.bf16.msra.mxu0 0
    %1898 = vmatprep.subr.bf16.mxu0 0
    %1899 = vmatpush2.bf16.msra.mxu0 0
    %1900 = vmatprep.subr.bf16.mxu0 0
    %1901 = vmatpush2.bf16.msra.mxu0 0
    %1902 = vmatprep.mubr.bf16.mxu0 0
    %1903 = vmatmul.mubr.bf16.gmra.mxu0 %v1411
    %v1904 = vpop.f32.mrf.mxu0
    %v1905 = vadd.f32 0.0, %v1904
    %v1906 = vpop.f32.mrf.mxu0
    %v1907 = vadd.f32 0.0, %v1906
    %v1908 = vpop.f32.mrf.mxu0
    %v1909 = vadd.f32 0.0, %v1908
    %v1910 = vpop.f32.mrf.mxu0
    %v1911 = vadd.f32 0.0, %v1910
    %1912 = vmatprep.mubr.bf16.mxu0 0
    %1913 = vmatmul.mubr.bf16.gmra.mxu0 %v1412
    %v1914 = vpop.f32.mrf.mxu0
    %v1915 = vadd.f32 0.0, %v1914
    %v1916 = vpop.f32.mrf.mxu0
    %v1917 = vadd.f32 0.0, %v1916
    %v1918 = vpop.f32.mrf.mxu0
    %v1919 = vadd.f32 0.0, %v1918
    %v1920 = vpop.f32.mrf.mxu0
    %v1921 = vadd.f32 0.0, %v1920
    %1922 = vmatprep.mubr.bf16.mxu0 0
    %1923 = vmatmul.mubr.bf16.gmra.mxu0 %v1413
    %v1924 = vpop.f32.mrf.mxu0
    %v1925 = vadd.f32 0.0, %v1924
    %v1926 = vpop.f32.mrf.mxu0
    %v1927 = vadd.f32 0.0, %v1926
    %v1928 = vpop.f32.mrf.mxu0
    %v1929 = vadd.f32 0.0, %v1928
    %v1930 = vpop.f32.mrf.mxu0
    %v1931 = vadd.f32 0.0, %v1930
    %1932 = vmatprep.mubr.bf16.mxu0 0
    %1933 = vmatmul.mubr.bf16.gmra.mxu0 %v1414
    %v1934 = vpop.f32.mrf.mxu0
    %v1935 = vadd.f32 0.0, %v1934
    %v1936 = vpop.f32.mrf.mxu0
    %v1937 = vadd.f32 0.0, %v1936
    %v1938 = vpop.f32.mrf.mxu0
    %v1939 = vadd.f32 0.0, %v1938
    %v1940 = vpop.f32.mrf.mxu0
    %v1941 = vadd.f32 0.0, %v1940
    %1942 = vdwg.mxu0
    %v1943 = vadd.f32 %v1735, %v1905
    %v1944 = vadd.f32 %v1737, %v1907
    %v1945 = vadd.f32 %v1739, %v1909
    %v1946 = vadd.f32 %v1741, %v1911
    %v1947 = vadd.f32 %v1745, %v1915
    %v1948 = vadd.f32 %v1747, %v1917
    %v1949 = vadd.f32 %v1749, %v1919
    %v1950 = vadd.f32 %v1751, %v1921
    %v1951 = vadd.f32 %v1755, %v1925
    %v1952 = vadd.f32 %v1757, %v1927
    %v1953 = vadd.f32 %v1759, %v1929
    %v1954 = vadd.f32 %v1761, %v1931
    %v1955 = vadd.f32 %v1765, %v1935
    %v1956 = vadd.f32 %v1767, %v1937
    %v1957 = vadd.f32 %v1769, %v1939
    %v1958 = vadd.f32 %v1771, %v1941
    %s1959 = scalar_lea.vmem %s3, 384
    %v1960 = vld [vmem:[%s1959] sm:$0xff]
    %v1961 = vld [vmem:[%s1959 + $0x8] sm:$0xff]
    %v1962 = vld [vmem:[%s1959 + $0x10] sm:$0xff]
    %v1963 = vld [vmem:[%s1959 + $0x18] sm:$0xff]
    %v1964 = vld [vmem:[%s1959 + $0x20] sm:$0xff]
    %v1965 = vld [vmem:[%s1959 + $0x28] sm:$0xff]
    %v1966 = vld [vmem:[%s1959 + $0x30] sm:$0xff]
    %v1967 = vld [vmem:[%s1959 + $0x38] sm:$0xff]
    %v1968 = vld [vmem:[%s1959 + $0x40] sm:$0xff]
    %v1969 = vld [vmem:[%s1959 + $0x48] sm:$0xff]
    %v1970 = vld [vmem:[%s1959 + $0x50] sm:$0xff]
    %v1971 = vld [vmem:[%s1959 + $0x58] sm:$0xff]
    %v1972 = vld [vmem:[%s1959 + $0x60] sm:$0xff]
    %v1973 = vld [vmem:[%s1959 + $0x68] sm:$0xff]
    %v1974 = vld [vmem:[%s1959 + $0x70] sm:$0xff]
    %v1975 = vld [vmem:[%s1959 + $0x78] sm:$0xff]
    %v1977 = vrot.slane %v1415, 4
    %v1978 = vsel %vm146, %v1461, %v1977
    %v1996 = vunpack.c.l.b16 %v1960
    %v1997 = vunpack.c.h.b16 %v1960
    %v1998 = vunpack.c.l.b16 %v1961
    %v1999 = vunpack.c.h.b16 %v1961
    %v2000 = vunpack.c.l.b16 %v1962
    %v2001 = vunpack.c.h.b16 %v1962
    %v2002 = vunpack.c.l.b16 %v1963
    %v2003 = vunpack.c.h.b16 %v1963
    %v2004 = vunpack.c.l.b16 %v1964
    %v2005 = vunpack.c.h.b16 %v1964
    %v2006 = vunpack.c.l.b16 %v1965
    %v2007 = vunpack.c.h.b16 %v1965
    %v2008 = vunpack.c.l.b16 %v1966
    %v2009 = vunpack.c.h.b16 %v1966
    %v2010 = vunpack.c.l.b16 %v1967
    %v2011 = vunpack.c.h.b16 %v1967
    %v2012 = vunpack.c.l.b16 %v1968
    %v2013 = vunpack.c.h.b16 %v1968
    %v2014 = vunpack.c.l.b16 %v1969
    %v2015 = vunpack.c.h.b16 %v1969
    %v2016 = vunpack.c.l.b16 %v1970
    %v2017 = vunpack.c.h.b16 %v1970
    %v2018 = vunpack.c.l.b16 %v1971
    %v2019 = vunpack.c.h.b16 %v1971
    %v2020 = vunpack.c.l.b16 %v1972
    %v2021 = vunpack.c.h.b16 %v1972
    %v2022 = vunpack.c.l.b16 %v1973
    %v2023 = vunpack.c.h.b16 %v1973
    %v2024 = vunpack.c.l.b16 %v1974
    %v2025 = vunpack.c.h.b16 %v1974
    %v2026 = vunpack.c.l.b16 %v1975
    %v2027 = vunpack.c.h.b16 %v1975
    %v2028 = vpack.c.b16 %v1998, %v1996
    %v2029 = vpack.c.b16 %v1999, %v1997
    %v2030 = vpack.c.b16 %v2002, %v2000
    %v2031 = vpack.c.b16 %v2003, %v2001
    %v2032 = vpack.c.b16 %v2006, %v2004
    %v2033 = vpack.c.b16 %v2007, %v2005
    %v2034 = vpack.c.b16 %v2010, %v2008
    %v2035 = vpack.c.b16 %v2011, %v2009
    %v2036 = vpack.c.b16 %v2014, %v2012
    %v2037 = vpack.c.b16 %v2015, %v2013
    %v2038 = vpack.c.b16 %v2018, %v2016
    %v2039 = vpack.c.b16 %v2019, %v2017
    %v2040 = vpack.c.b16 %v2022, %v2020
    %v2041 = vpack.c.b16 %v2023, %v2021
    %v2042 = vpack.c.b16 %v2026, %v2024
    %v2043 = vpack.c.b16 %v2027, %v2025
    %2060 = vmatprep.subr.bf16.mxu0 %v2043
    %2061 = vmatpush1.bf16.msra.mxu0 %v2042
    %2062 = vmatprep.subr.bf16.mxu0 %v2041
    %2063 = vmatpush1.bf16.msra.mxu0 %v2040
    %2064 = vmatprep.subr.bf16.mxu0 %v2039
    %2065 = vmatpush1.bf16.msra.mxu0 %v2038
    %2066 = vmatprep.subr.bf16.mxu0 %v2037
    %2067 = vmatpush1.bf16.msra.mxu0 %v2036
    %2068 = vmatprep.subr.bf16.mxu0 %v2035
    %2069 = vmatpush1.bf16.msra.mxu0 %v2034
    %2070 = vmatprep.subr.bf16.mxu0 %v2033
    %2071 = vmatpush1.bf16.msra.mxu0 %v2032
    %2072 = vmatprep.subr.bf16.mxu0 %v2031
    %2073 = vmatpush1.bf16.msra.mxu0 %v2030
    %2074 = vmatprep.subr.bf16.mxu0 %v2029
    %2075 = vmatpush1.bf16.msra.mxu0 %v2028
    %2076 = vmatprep.subr.bf16.mxu0 0
    %2077 = vmatpush2.bf16.msra.mxu0 0
    %2078 = vmatprep.subr.bf16.mxu0 0
    %2079 = vmatpush2.bf16.msra.mxu0 0
    %2080 = vmatprep.subr.bf16.mxu0 0
    %2081 = vmatpush2.bf16.msra.mxu0 0
    %2082 = vmatprep.subr.bf16.mxu0 0
    %2083 = vmatpush2.bf16.msra.mxu0 0
    %2084 = vmatprep.subr.bf16.mxu0 0
    %2085 = vmatpush2.bf16.msra.mxu0 0
    %2086 = vmatprep.subr.bf16.mxu0 0
    %2087 = vmatpush2.bf16.msra.mxu0 0
    %2088 = vmatprep.subr.bf16.mxu0 0
    %2089 = vmatpush2.bf16.msra.mxu0 0
    %2090 = vmatprep.subr.bf16.mxu0 0
    %2091 = vmatpush2.bf16.msra.mxu0 0
    %2092 = vmatprep.mubr.bf16.mxu0 0
    %2093 = vmatmul.mubr.bf16.gmra.mxu0 %v1458
    %v2094 = vpop.f32.mrf.mxu0
    %v2095 = vadd.f32 0.0, %v2094
    %v2096 = vpop.f32.mrf.mxu0
    %v2097 = vadd.f32 0.0, %v2096
    %v2098 = vpop.f32.mrf.mxu0
    %v2099 = vadd.f32 0.0, %v2098
    %v2100 = vpop.f32.mrf.mxu0
    %v2101 = vadd.f32 0.0, %v2100
    %2102 = vmatprep.mubr.bf16.mxu0 0
    %2103 = vmatmul.mubr.bf16.gmra.mxu0 %v1460
    %v2104 = vpop.f32.mrf.mxu0
    %v2105 = vadd.f32 0.0, %v2104
    %v2106 = vpop.f32.mrf.mxu0
    %v2107 = vadd.f32 0.0, %v2106
    %v2108 = vpop.f32.mrf.mxu0
    %v2109 = vadd.f32 0.0, %v2108
    %v2110 = vpop.f32.mrf.mxu0
    %v2111 = vadd.f32 0.0, %v2110
    %2112 = vmatprep.mubr.bf16.mxu0 0
    %2113 = vmatmul.mubr.bf16.gmra.mxu0 %v1462
    %v2114 = vpop.f32.mrf.mxu0
    %v2115 = vadd.f32 0.0, %v2114
    %v2116 = vpop.f32.mrf.mxu0
    %v2117 = vadd.f32 0.0, %v2116
    %v2118 = vpop.f32.mrf.mxu0
    %v2119 = vadd.f32 0.0, %v2118
    %v2120 = vpop.f32.mrf.mxu0
    %v2121 = vadd.f32 0.0, %v2120
    %2122 = vmatprep.mubr.bf16.mxu0 0
    %2123 = vmatmul.mubr.bf16.gmra.mxu0 %v1978
    %v2124 = vpop.f32.mrf.mxu0
    %v2125 = vadd.f32 0.0, %v2124
    %v2126 = vpop.f32.mrf.mxu0
    %v2127 = vadd.f32 0.0, %v2126
    %v2128 = vpop.f32.mrf.mxu0
    %v2129 = vadd.f32 0.0, %v2128
    %v2130 = vpop.f32.mrf.mxu0
    %v2131 = vadd.f32 0.0, %v2130
    %2132 = vdwg.mxu0
    %v2133 = vadd.f32 %v1943, %v2095
    %v2134 = vadd.f32 %v1944, %v2097
    %v2135 = vadd.f32 %v1945, %v2099
    %v2136 = vadd.f32 %v1946, %v2101
    %v2137 = vadd.f32 %v1947, %v2105
    %v2138 = vadd.f32 %v1948, %v2107
    %v2139 = vadd.f32 %v1949, %v2109
    %v2140 = vadd.f32 %v1950, %v2111
    %v2141 = vadd.f32 %v1951, %v2115
    %v2142 = vadd.f32 %v1952, %v2117
    %v2143 = vadd.f32 %v1953, %v2119
    %v2144 = vadd.f32 %v1954, %v2121
    %v2145 = vadd.f32 %v1955, %v2125
    %v2146 = vadd.f32 %v1956, %v2127
    %v2147 = vadd.f32 %v1957, %v2129
    %v2148 = vadd.f32 %v1958, %v2131
    %s2149 = scalar_lea.vmem %s3, 512
    %v2150 = vld [vmem:[%s2149] sm:$0xff]
    %v2151 = vld [vmem:[%s2149 + $0x8] sm:$0xff]
    %v2152 = vld [vmem:[%s2149 + $0x10] sm:$0xff]
    %v2153 = vld [vmem:[%s2149 + $0x18] sm:$0xff]
    %v2154 = vld [vmem:[%s2149 + $0x20] sm:$0xff]
    %v2155 = vld [vmem:[%s2149 + $0x28] sm:$0xff]
    %v2156 = vld [vmem:[%s2149 + $0x30] sm:$0xff]
    %v2157 = vld [vmem:[%s2149 + $0x38] sm:$0xff]
    %v2158 = vld [vmem:[%s2149 + $0x40] sm:$0xff]
    %v2159 = vld [vmem:[%s2149 + $0x48] sm:$0xff]
    %v2160 = vld [vmem:[%s2149 + $0x50] sm:$0xff]
    %v2161 = vld [vmem:[%s2149 + $0x58] sm:$0xff]
    %v2162 = vld [vmem:[%s2149 + $0x60] sm:$0xff]
    %v2163 = vld [vmem:[%s2149 + $0x68] sm:$0xff]
    %v2164 = vld [vmem:[%s2149 + $0x70] sm:$0xff]
    %v2165 = vld [vmem:[%s2149 + $0x78] sm:$0xff]
    %v2182 = vunpack.c.l.b16 %v2150
    %v2183 = vunpack.c.h.b16 %v2150
    %v2184 = vunpack.c.l.b16 %v2151
    %v2185 = vunpack.c.h.b16 %v2151
    %v2186 = vunpack.c.l.b16 %v2152
    %v2187 = vunpack.c.h.b16 %v2152
    %v2188 = vunpack.c.l.b16 %v2153
    %v2189 = vunpack.c.h.b16 %v2153
    %v2190 = vunpack.c.l.b16 %v2154
    %v2191 = vunpack.c.h.b16 %v2154
    %v2192 = vunpack.c.l.b16 %v2155
    %v2193 = vunpack.c.h.b16 %v2155
    %v2194 = vunpack.c.l.b16 %v2156
    %v2195 = vunpack.c.h.b16 %v2156
    %v2196 = vunpack.c.l.b16 %v2157
    %v2197 = vunpack.c.h.b16 %v2157
    %v2198 = vunpack.c.l.b16 %v2158
    %v2199 = vunpack.c.h.b16 %v2158
    %v2200 = vunpack.c.l.b16 %v2159
    %v2201 = vunpack.c.h.b16 %v2159
    %v2202 = vunpack.c.l.b16 %v2160
    %v2203 = vunpack.c.h.b16 %v2160
    %v2204 = vunpack.c.l.b16 %v2161
    %v2205 = vunpack.c.h.b16 %v2161
    %v2206 = vunpack.c.l.b16 %v2162
    %v2207 = vunpack.c.h.b16 %v2162
    %v2208 = vunpack.c.l.b16 %v2163
    %v2209 = vunpack.c.h.b16 %v2163
    %v2210 = vunpack.c.l.b16 %v2164
    %v2211 = vunpack.c.h.b16 %v2164
    %v2212 = vunpack.c.l.b16 %v2165
    %v2213 = vunpack.c.h.b16 %v2165
    %v2214 = vpack.c.b16 %v2184, %v2182
    %v2215 = vpack.c.b16 %v2185, %v2183
    %v2216 = vpack.c.b16 %v2188, %v2186
    %v2217 = vpack.c.b16 %v2189, %v2187
    %v2218 = vpack.c.b16 %v2192, %v2190
    %v2219 = vpack.c.b16 %v2193, %v2191
    %v2220 = vpack.c.b16 %v2196, %v2194
    %v2221 = vpack.c.b16 %v2197, %v2195
    %v2222 = vpack.c.b16 %v2200, %v2198
    %v2223 = vpack.c.b16 %v2201, %v2199
    %v2224 = vpack.c.b16 %v2204, %v2202
    %v2225 = vpack.c.b16 %v2205, %v2203
    %v2226 = vpack.c.b16 %v2208, %v2206
    %v2227 = vpack.c.b16 %v2209, %v2207
    %v2228 = vpack.c.b16 %v2212, %v2210
    %v2229 = vpack.c.b16 %v2213, %v2211
    %2246 = vmatprep.subr.bf16.mxu0 %v2229
    %2247 = vmatpush1.bf16.msra.mxu0 %v2228
    %2248 = vmatprep.subr.bf16.mxu0 %v2227
    %2249 = vmatpush1.bf16.msra.mxu0 %v2226
    %2250 = vmatprep.subr.bf16.mxu0 %v2225
    %2251 = vmatpush1.bf16.msra.mxu0 %v2224
    %2252 = vmatprep.subr.bf16.mxu0 %v2223
    %2253 = vmatpush1.bf16.msra.mxu0 %v2222
    %2254 = vmatprep.subr.bf16.mxu0 %v2221
    %2255 = vmatpush1.bf16.msra.mxu0 %v2220
    %2256 = vmatprep.subr.bf16.mxu0 %v2219
    %2257 = vmatpush1.bf16.msra.mxu0 %v2218
    %2258 = vmatprep.subr.bf16.mxu0 %v2217
    %2259 = vmatpush1.bf16.msra.mxu0 %v2216
    %2260 = vmatprep.subr.bf16.mxu0 %v2215
    %2261 = vmatpush1.bf16.msra.mxu0 %v2214
    %2262 = vmatprep.subr.bf16.mxu0 0
    %2263 = vmatpush2.bf16.msra.mxu0 0
    %2264 = vmatprep.subr.bf16.mxu0 0
    %2265 = vmatpush2.bf16.msra.mxu0 0
    %2266 = vmatprep.subr.bf16.mxu0 0
    %2267 = vmatpush2.bf16.msra.mxu0 0
    %2268 = vmatprep.subr.bf16.mxu0 0
    %2269 = vmatpush2.bf16.msra.mxu0 0
    %2270 = vmatprep.subr.bf16.mxu0 0
    %2271 = vmatpush2.bf16.msra.mxu0 0
    %2272 = vmatprep.subr.bf16.mxu0 0
    %2273 = vmatpush2.bf16.msra.mxu0 0
    %2274 = vmatprep.subr.bf16.mxu0 0
    %2275 = vmatpush2.bf16.msra.mxu0 0
    %2276 = vmatprep.subr.bf16.mxu0 0
    %2277 = vmatpush2.bf16.msra.mxu0 0
    %2278 = vmatprep.mubr.bf16.mxu0 0
    %2279 = vmatmul.mubr.bf16.gmra.mxu0 %v1412
    %v2280 = vpop.f32.mrf.mxu0
    %v2281 = vadd.f32 0.0, %v2280
    %v2282 = vpop.f32.mrf.mxu0
    %v2283 = vadd.f32 0.0, %v2282
    %v2284 = vpop.f32.mrf.mxu0
    %v2285 = vadd.f32 0.0, %v2284
    %v2286 = vpop.f32.mrf.mxu0
    %v2287 = vadd.f32 0.0, %v2286
    %2288 = vmatprep.mubr.bf16.mxu0 0
    %2289 = vmatmul.mubr.bf16.gmra.mxu0 %v1413
    %v2290 = vpop.f32.mrf.mxu0
    %v2291 = vadd.f32 0.0, %v2290
    %v2292 = vpop.f32.mrf.mxu0
    %v2293 = vadd.f32 0.0, %v2292
    %v2294 = vpop.f32.mrf.mxu0
    %v2295 = vadd.f32 0.0, %v2294
    %v2296 = vpop.f32.mrf.mxu0
    %v2297 = vadd.f32 0.0, %v2296
    %2298 = vmatprep.mubr.bf16.mxu0 0
    %2299 = vmatmul.mubr.bf16.gmra.mxu0 %v1414
    %v2300 = vpop.f32.mrf.mxu0
    %v2301 = vadd.f32 0.0, %v2300
    %v2302 = vpop.f32.mrf.mxu0
    %v2303 = vadd.f32 0.0, %v2302
    %v2304 = vpop.f32.mrf.mxu0
    %v2305 = vadd.f32 0.0, %v2304
    %v2306 = vpop.f32.mrf.mxu0
    %v2307 = vadd.f32 0.0, %v2306
    %2308 = vmatprep.mubr.bf16.mxu0 0
    %2309 = vmatmul.mubr.bf16.gmra.mxu0 %v1415
    %v2310 = vpop.f32.mrf.mxu0
    %v2311 = vadd.f32 0.0, %v2310
    %v2312 = vpop.f32.mrf.mxu0
    %v2313 = vadd.f32 0.0, %v2312
    %v2314 = vpop.f32.mrf.mxu0
    %v2315 = vadd.f32 0.0, %v2314
    %v2316 = vpop.f32.mrf.mxu0
    %v2317 = vadd.f32 0.0, %v2316
    %2318 = vdwg.mxu0
    %v2319 = vadd.f32 %v2133, %v2281
    %v2320 = vadd.f32 %v2134, %v2283
    %v2321 = vadd.f32 %v2135, %v2285
    %v2322 = vadd.f32 %v2136, %v2287
    %v2323 = vadd.f32 %v2137, %v2291
    %v2324 = vadd.f32 %v2138, %v2293
    %v2325 = vadd.f32 %v2139, %v2295
    %v2326 = vadd.f32 %v2140, %v2297
    %v2327 = vadd.f32 %v2141, %v2301
    %v2328 = vadd.f32 %v2142, %v2303
    %v2329 = vadd.f32 %v2143, %v2305
    %v2330 = vadd.f32 %v2144, %v2307
    %v2331 = vadd.f32 %v2145, %v2311
    %v2332 = vadd.f32 %v2146, %v2313
    %v2333 = vadd.f32 %v2147, %v2315
    %v2334 = vadd.f32 %v2148, %v2317
    %v2335 = vld [vmem:[#allocation4] sm:$0x3]
    %v2337 = vlaneseq
    %v2338 = vshrl.u32 %v2337, 7
    %v2339 = vsub.s32 0, %v2338
    %v2340 = vrot.slane %v2335, %v2339
    %v2341 = vlaneseq
    %v2342 = vshrl.u32 %v2341, 7
    %v2343 = vsub.s32 1, %v2342
    %v2344 = vrot.slane %v2335, %v2343
    %v2347 = vadd.f32 %v2319, %v2340
    %v2348 = vadd.f32 %v2320, %v2344
    %v2349 = vadd.f32 %v2321, %v2340
    %v2350 = vadd.f32 %v2322, %v2344
    %v2351 = vadd.f32 %v2323, %v2340
    %v2352 = vadd.f32 %v2324, %v2344
    %v2353 = vadd.f32 %v2325, %v2340
    %v2354 = vadd.f32 %v2326, %v2344
    %v2355 = vadd.f32 %v2327, %v2340
    %v2356 = vadd.f32 %v2328, %v2344
    %v2357 = vadd.f32 %v2329, %v2340
    %v2358 = vadd.f32 %v2330, %v2344
    %v2359 = vadd.f32 %v2331, %v2340
    %v2360 = vadd.f32 %v2332, %v2344
    %v2361 = vadd.f32 %v2333, %v2340
    %v2362 = vadd.f32 %v2334, %v2344
    %v2363 = vmax.f32 %v2347, %v2349
    %v2364 = vmax.f32 %v2348, %v2350
    %v2365 = vmax.f32 %v2351, %v2353
    %v2366 = vmax.f32 %v2352, %v2354
    %v2367 = vmax.f32 %v2355, %v2357
    %v2368 = vmax.f32 %v2356, %v2358
    %v2369 = vmax.f32 %v2359, %v2361
    %v2370 = vmax.f32 %v2360, %v2362
    %v2371 = vmax.f32 %v2363, %v2364
    %v2372 = vmax.f32 %v2365, %v2366
    %v2373 = vmax.f32 %v2367, %v2368
    %v2374 = vmax.f32 %v2369, %v2370
    %v2375 = vmax.f32 %v2371, 0.0
    %v2376 = vmax.f32 %v2372, 0.0
    %v2377 = vmax.f32 %v2373, 0.0
    %v2378 = vmax.f32 %v2374, 0.0
    %v2379 = vpack.c.bf16 %v2376, %v2375
    %v2380 = vpack.c.bf16 %v2378, %v2377
    %v2381 = vld [vmem:[%s5] sm:$0xf]
    %v2382 = vld [vmem:[%s5 + $0x4] sm:$0xf]
    %v2383 = vld [vmem:[%s5 + $0x8] sm:$0xf]
    %v2384 = vld [vmem:[%s5 + $0xc] sm:$0xf]
    %v2385 = vld [vmem:[%s5 + $0x10] sm:$0xf]
    %v2386 = vld [vmem:[%s5 + $0x14] sm:$0xf]
    %v2387 = vld [vmem:[%s5 + $0x18] sm:$0xf]
    %v2388 = vld [vmem:[%s5 + $0x1c] sm:$0xf]
    %v2389 = vld [vmem:[%s5 + $0x20] sm:$0xf]
    %v2390 = vld [vmem:[%s5 + $0x24] sm:$0xf]
    %v2391 = vld [vmem:[%s5 + $0x28] sm:$0xf]
    %v2392 = vld [vmem:[%s5 + $0x2c] sm:$0xf]
    %v2393 = vld [vmem:[%s5 + $0x30] sm:$0xf]
    %v2394 = vld [vmem:[%s5 + $0x34] sm:$0xf]
    %v2395 = vld [vmem:[%s5 + $0x38] sm:$0xf]
    %v2396 = vld [vmem:[%s5 + $0x3c] sm:$0xf]
    %s2397 = scalar_lea.vmem %s5, 64
    %v2398 = vld [vmem:[%s2397] sm:$0xf]
    %v2399 = vld [vmem:[%s2397 + $0x4] sm:$0xf]
    %v2400 = vld [vmem:[%s2397 + $0x8] sm:$0xf]
    %v2401 = vld [vmem:[%s2397 + $0xc] sm:$0xf]
    %v2402 = vld [vmem:[%s2397 + $0x10] sm:$0xf]
    %v2403 = vld [vmem:[%s2397 + $0x14] sm:$0xf]
    %v2404 = vld [vmem:[%s2397 + $0x18] sm:$0xf]
    %v2405 = vld [vmem:[%s2397 + $0x1c] sm:$0xf]
    %v2406 = vld [vmem:[%s2397 + $0x20] sm:$0xf]
    %v2407 = vld [vmem:[%s2397 + $0x24] sm:$0xf]
    %v2408 = vld [vmem:[%s2397 + $0x28] sm:$0xf]
    %v2409 = vld [vmem:[%s2397 + $0x2c] sm:$0xf]
    %v2410 = vld [vmem:[%s2397 + $0x30] sm:$0xf]
    %v2411 = vld [vmem:[%s2397 + $0x34] sm:$0xf]
    %v2412 = vld [vmem:[%s2397 + $0x38] sm:$0xf]
    %v2413 = vld [vmem:[%s2397 + $0x3c] sm:$0xf]
    %v2415 = vrot.slane %v2379, 4
    %v2433 = vunpack.c.l.b16 %v2398
    %v2434 = vunpack.c.l.b16 %v2399
    %v2435 = vunpack.c.l.b16 %v2400
    %v2436 = vunpack.c.l.b16 %v2401
    %v2437 = vunpack.c.l.b16 %v2402
    %v2438 = vunpack.c.l.b16 %v2403
    %v2439 = vunpack.c.l.b16 %v2404
    %v2440 = vunpack.c.l.b16 %v2405
    %v2441 = vunpack.c.l.b16 %v2406
    %v2442 = vunpack.c.l.b16 %v2407
    %v2443 = vunpack.c.l.b16 %v2408
    %v2444 = vunpack.c.l.b16 %v2409
    %v2445 = vunpack.c.l.b16 %v2410
    %v2446 = vunpack.c.l.b16 %v2411
    %v2447 = vunpack.c.l.b16 %v2412
    %v2448 = vunpack.c.l.b16 %v2413
    %v2449 = vpack.c.b16 %v2434, %v2433
    %v2450 = vpack.c.b16 %v2436, %v2435
    %v2451 = vpack.c.b16 %v2438, %v2437
    %v2452 = vpack.c.b16 %v2440, %v2439
    %v2453 = vpack.c.b16 %v2442, %v2441
    %v2454 = vpack.c.b16 %v2444, %v2443
    %v2455 = vpack.c.b16 %v2446, %v2445
    %v2456 = vpack.c.b16 %v2448, %v2447
    %2465 = vmatprep.subr.bf16.mxu0 0
    %2466 = vmatpush1.bf16.msra.mxu0 %v2456
    %2467 = vmatprep.subr.bf16.mxu0 0
    %2468 = vmatpush1.bf16.msra.mxu0 %v2455
    %2469 = vmatprep.subr.bf16.mxu0 0
    %2470 = vmatpush1.bf16.msra.mxu0 %v2454
    %2471 = vmatprep.subr.bf16.mxu0 0
    %2472 = vmatpush1.bf16.msra.mxu0 %v2453
    %2473 = vmatprep.subr.bf16.mxu0 0
    %2474 = vmatpush1.bf16.msra.mxu0 %v2452
    %2475 = vmatprep.subr.bf16.mxu0 0
    %2476 = vmatpush1.bf16.msra.mxu0 %v2451
    %2477 = vmatprep.subr.bf16.mxu0 0
    %2478 = vmatpush1.bf16.msra.mxu0 %v2450
    %2479 = vmatprep.subr.bf16.mxu0 0
    %2480 = vmatpush1.bf16.msra.mxu0 %v2449
    %2481 = vmatprep.subr.bf16.mxu0 0
    %2482 = vmatpush2.bf16.msra.mxu0 0
    %2483 = vmatprep.subr.bf16.mxu0 0
    %2484 = vmatpush2.bf16.msra.mxu0 0
    %2485 = vmatprep.subr.bf16.mxu0 0
    %2486 = vmatpush2.bf16.msra.mxu0 0
    %2487 = vmatprep.subr.bf16.mxu0 0
    %2488 = vmatpush2.bf16.msra.mxu0 0
    %2489 = vmatprep.subr.bf16.mxu0 0
    %2490 = vmatpush2.bf16.msra.mxu0 0
    %2491 = vmatprep.subr.bf16.mxu0 0
    %2492 = vmatpush2.bf16.msra.mxu0 0
    %2493 = vmatprep.subr.bf16.mxu0 0
    %2494 = vmatpush2.bf16.msra.mxu0 0
    %2495 = vmatprep.subr.bf16.mxu0 0
    %2496 = vmatpush2.bf16.msra.mxu0 0
    %2497 = vmatprep.mubr.bf16.mxu0 0
    %2498 = vmatmul.mubr.bf16.gmra.mxu0 %v2415
    %v2499 = vpop.f32.mrf.mxu0
    %v2500 = vadd.f32 0.0, %v2499
    %v2501 = vpop.f32.mrf.mxu0
    %v2502 = vpop.f32.mrf.mxu0
    %v2503 = vpop.f32.mrf.mxu0
    %2504 = vdwg.mxu0
    %v2521 = vunpack.c.l.b16 %v2381
    %v2522 = vunpack.c.l.b16 %v2382
    %v2523 = vunpack.c.l.b16 %v2383
    %v2524 = vunpack.c.l.b16 %v2384
    %v2525 = vunpack.c.l.b16 %v2385
    %v2526 = vunpack.c.l.b16 %v2386
    %v2527 = vunpack.c.l.b16 %v2387
    %v2528 = vunpack.c.l.b16 %v2388
    %v2529 = vunpack.c.l.b16 %v2389
    %v2530 = vunpack.c.l.b16 %v2390
    %v2531 = vunpack.c.l.b16 %v2391
    %v2532 = vunpack.c.l.b16 %v2392
    %v2533 = vunpack.c.l.b16 %v2393
    %v2534 = vunpack.c.l.b16 %v2394
    %v2535 = vunpack.c.l.b16 %v2395
    %v2536 = vunpack.c.l.b16 %v2396
    %v2537 = vpack.c.b16 %v2522, %v2521
    %v2538 = vpack.c.b16 %v2524, %v2523
    %v2539 = vpack.c.b16 %v2526, %v2525
    %v2540 = vpack.c.b16 %v2528, %v2527
    %v2541 = vpack.c.b16 %v2530, %v2529
    %v2542 = vpack.c.b16 %v2532, %v2531
    %v2543 = vpack.c.b16 %v2534, %v2533
    %v2544 = vpack.c.b16 %v2536, %v2535
    %2553 = vmatprep.subr.bf16.mxu0 0
    %2554 = vmatpush1.bf16.msra.mxu0 %v2544
    %2555 = vmatprep.subr.bf16.mxu0 0
    %2556 = vmatpush1.bf16.msra.mxu0 %v2543
    %2557 = vmatprep.subr.bf16.mxu0 0
    %2558 = vmatpush1.bf16.msra.mxu0 %v2542
    %2559 = vmatprep.subr.bf16.mxu0 0
    %2560 = vmatpush1.bf16.msra.mxu0 %v2541
    %2561 = vmatprep.subr.bf16.mxu0 0
    %2562 = vmatpush1.bf16.msra.mxu0 %v2540
    %2563 = vmatprep.subr.bf16.mxu0 0
    %2564 = vmatpush1.bf16.msra.mxu0 %v2539
    %2565 = vmatprep.subr.bf16.mxu0 0
    %2566 = vmatpush1.bf16.msra.mxu0 %v2538
    %2567 = vmatprep.subr.bf16.mxu0 0
    %2568 = vmatpush1.bf16.msra.mxu0 %v2537
    %2569 = vmatprep.subr.bf16.mxu0 0
    %2570 = vmatpush2.bf16.msra.mxu0 0
    %2571 = vmatprep.subr.bf16.mxu0 0
    %2572 = vmatpush2.bf16.msra.mxu0 0
    %2573 = vmatprep.subr.bf16.mxu0 0
    %2574 = vmatpush2.bf16.msra.mxu0 0
    %2575 = vmatprep.subr.bf16.mxu0 0
    %2576 = vmatpush2.bf16.msra.mxu0 0
    %2577 = vmatprep.subr.bf16.mxu0 0
    %2578 = vmatpush2.bf16.msra.mxu0 0
    %2579 = vmatprep.subr.bf16.mxu0 0
    %2580 = vmatpush2.bf16.msra.mxu0 0
    %2581 = vmatprep.subr.bf16.mxu0 0
    %2582 = vmatpush2.bf16.msra.mxu0 0
    %2583 = vmatprep.subr.bf16.mxu0 0
    %2584 = vmatpush2.bf16.msra.mxu0 0
    %2585 = vmatprep.mubr.bf16.mxu0 0
    %2586 = vmatmul.mubr.bf16.gmra.mxu0 %v2379
    %v2587 = vpop.f32.mrf.mxu0
    %v2588 = vadd.f32 %v2500, %v2587
    %v2589 = vpop.f32.mrf.mxu0
    %v2590 = vpop.f32.mrf.mxu0
    %v2591 = vpop.f32.mrf.mxu0
    %2592 = vdwg.mxu0
    %s2593 = scalar_lea.vmem %s5, 128
    %v2594 = vld [vmem:[%s2593] sm:$0xf]
    %v2595 = vld [vmem:[%s2593 + $0x4] sm:$0xf]
    %v2596 = vld [vmem:[%s2593 + $0x8] sm:$0xf]
    %v2597 = vld [vmem:[%s2593 + $0xc] sm:$0xf]
    %v2598 = vld [vmem:[%s2593 + $0x10] sm:$0xf]
    %v2599 = vld [vmem:[%s2593 + $0x14] sm:$0xf]
    %v2600 = vld [vmem:[%s2593 + $0x18] sm:$0xf]
    %v2601 = vld [vmem:[%s2593 + $0x1c] sm:$0xf]
    %v2602 = vld [vmem:[%s2593 + $0x20] sm:$0xf]
    %v2603 = vld [vmem:[%s2593 + $0x24] sm:$0xf]
    %v2604 = vld [vmem:[%s2593 + $0x28] sm:$0xf]
    %v2605 = vld [vmem:[%s2593 + $0x2c] sm:$0xf]
    %v2606 = vld [vmem:[%s2593 + $0x30] sm:$0xf]
    %v2607 = vld [vmem:[%s2593 + $0x34] sm:$0xf]
    %v2608 = vld [vmem:[%s2593 + $0x38] sm:$0xf]
    %v2609 = vld [vmem:[%s2593 + $0x3c] sm:$0xf]
    %v2626 = vunpack.c.l.b16 %v2594
    %v2627 = vunpack.c.l.b16 %v2595
    %v2628 = vunpack.c.l.b16 %v2596
    %v2629 = vunpack.c.l.b16 %v2597
    %v2630 = vunpack.c.l.b16 %v2598
    %v2631 = vunpack.c.l.b16 %v2599
    %v2632 = vunpack.c.l.b16 %v2600
    %v2633 = vunpack.c.l.b16 %v2601
    %v2634 = vunpack.c.l.b16 %v2602
    %v2635 = vunpack.c.l.b16 %v2603
    %v2636 = vunpack.c.l.b16 %v2604
    %v2637 = vunpack.c.l.b16 %v2605
    %v2638 = vunpack.c.l.b16 %v2606
    %v2639 = vunpack.c.l.b16 %v2607
    %v2640 = vunpack.c.l.b16 %v2608
    %v2641 = vunpack.c.l.b16 %v2609
    %v2642 = vpack.c.b16 %v2627, %v2626
    %v2643 = vpack.c.b16 %v2629, %v2628
    %v2644 = vpack.c.b16 %v2631, %v2630
    %v2645 = vpack.c.b16 %v2633, %v2632
    %v2646 = vpack.c.b16 %v2635, %v2634
    %v2647 = vpack.c.b16 %v2637, %v2636
    %v2648 = vpack.c.b16 %v2639, %v2638
    %v2649 = vpack.c.b16 %v2641, %v2640
    %2658 = vmatprep.subr.bf16.mxu0 0
    %2659 = vmatpush1.bf16.msra.mxu0 %v2649
    %2660 = vmatprep.subr.bf16.mxu0 0
    %2661 = vmatpush1.bf16.msra.mxu0 %v2648
    %2662 = vmatprep.subr.bf16.mxu0 0
    %2663 = vmatpush1.bf16.msra.mxu0 %v2647
    %2664 = vmatprep.subr.bf16.mxu0 0
    %2665 = vmatpush1.bf16.msra.mxu0 %v2646
    %2666 = vmatprep.subr.bf16.mxu0 0
    %2667 = vmatpush1.bf16.msra.mxu0 %v2645
    %2668 = vmatprep.subr.bf16.mxu0 0
    %2669 = vmatpush1.bf16.msra.mxu0 %v2644
    %2670 = vmatprep.subr.bf16.mxu0 0
    %2671 = vmatpush1.bf16.msra.mxu0 %v2643
    %2672 = vmatprep.subr.bf16.mxu0 0
    %2673 = vmatpush1.bf16.msra.mxu0 %v2642
    %2674 = vmatprep.subr.bf16.mxu0 0
    %2675 = vmatpush2.bf16.msra.mxu0 0
    %2676 = vmatprep.subr.bf16.mxu0 0
    %2677 = vmatpush2.bf16.msra.mxu0 0
    %2678 = vmatprep.subr.bf16.mxu0 0
    %2679 = vmatpush2.bf16.msra.mxu0 0
    %2680 = vmatprep.subr.bf16.mxu0 0
    %2681 = vmatpush2.bf16.msra.mxu0 0
    %2682 = vmatprep.subr.bf16.mxu0 0
    %2683 = vmatpush2.bf16.msra.mxu0 0
    %2684 = vmatprep.subr.bf16.mxu0 0
    %2685 = vmatpush2.bf16.msra.mxu0 0
    %2686 = vmatprep.subr.bf16.mxu0 0
    %2687 = vmatpush2.bf16.msra.mxu0 0
    %2688 = vmatprep.subr.bf16.mxu0 0
    %2689 = vmatpush2.bf16.msra.mxu0 0
    %2690 = vmatprep.mubr.bf16.mxu0 0
    %2691 = vmatmul.mubr.bf16.gmra.mxu0 %v2380
    %v2692 = vpop.f32.mrf.mxu0
    %v2693 = vadd.f32 0.0, %v2692
    %v2694 = vpop.f32.mrf.mxu0
    %v2695 = vpop.f32.mrf.mxu0
    %v2696 = vpop.f32.mrf.mxu0
    %2697 = vdwg.mxu0
    %v2698 = vadd.f32 %v2588, %v2693
    %s2699 = scalar_lea.vmem %s5, 192
    %v2700 = vld [vmem:[%s2699] sm:$0xf]
    %v2701 = vld [vmem:[%s2699 + $0x4] sm:$0xf]
    %v2702 = vld [vmem:[%s2699 + $0x8] sm:$0xf]
    %v2703 = vld [vmem:[%s2699 + $0xc] sm:$0xf]
    %v2704 = vld [vmem:[%s2699 + $0x10] sm:$0xf]
    %v2705 = vld [vmem:[%s2699 + $0x14] sm:$0xf]
    %v2706 = vld [vmem:[%s2699 + $0x18] sm:$0xf]
    %v2707 = vld [vmem:[%s2699 + $0x1c] sm:$0xf]
    %v2708 = vld [vmem:[%s2699 + $0x20] sm:$0xf]
    %v2709 = vld [vmem:[%s2699 + $0x24] sm:$0xf]
    %v2710 = vld [vmem:[%s2699 + $0x28] sm:$0xf]
    %v2711 = vld [vmem:[%s2699 + $0x2c] sm:$0xf]
    %v2712 = vld [vmem:[%s2699 + $0x30] sm:$0xf]
    %v2713 = vld [vmem:[%s2699 + $0x34] sm:$0xf]
    %v2714 = vld [vmem:[%s2699 + $0x38] sm:$0xf]
    %v2715 = vld [vmem:[%s2699 + $0x3c] sm:$0xf]
    %v2717 = vrot.slane %v2380, 4
    %v2735 = vunpack.c.l.b16 %v2700
    %v2736 = vunpack.c.l.b16 %v2701
    %v2737 = vunpack.c.l.b16 %v2702
    %v2738 = vunpack.c.l.b16 %v2703
    %v2739 = vunpack.c.l.b16 %v2704
    %v2740 = vunpack.c.l.b16 %v2705
    %v2741 = vunpack.c.l.b16 %v2706
    %v2742 = vunpack.c.l.b16 %v2707
    %v2743 = vunpack.c.l.b16 %v2708
    %v2744 = vunpack.c.l.b16 %v2709
    %v2745 = vunpack.c.l.b16 %v2710
    %v2746 = vunpack.c.l.b16 %v2711
    %v2747 = vunpack.c.l.b16 %v2712
    %v2748 = vunpack.c.l.b16 %v2713
    %v2749 = vunpack.c.l.b16 %v2714
    %v2750 = vunpack.c.l.b16 %v2715
    %v2751 = vpack.c.b16 %v2736, %v2735
    %v2752 = vpack.c.b16 %v2738, %v2737
    %v2753 = vpack.c.b16 %v2740, %v2739
    %v2754 = vpack.c.b16 %v2742, %v2741
    %v2755 = vpack.c.b16 %v2744, %v2743
    %v2756 = vpack.c.b16 %v2746, %v2745
    %v2757 = vpack.c.b16 %v2748, %v2747
    %v2758 = vpack.c.b16 %v2750, %v2749
    %2767 = vmatprep.subr.bf16.mxu0 0
    %2768 = vmatpush1.bf16.msra.mxu0 %v2758
    %2769 = vmatprep.subr.bf16.mxu0 0
    %2770 = vmatpush1.bf16.msra.mxu0 %v2757
    %2771 = vmatprep.subr.bf16.mxu0 0
    %2772 = vmatpush1.bf16.msra.mxu0 %v2756
    %2773 = vmatprep.subr.bf16.mxu0 0
    %2774 = vmatpush1.bf16.msra.mxu0 %v2755
    %2775 = vmatprep.subr.bf16.mxu0 0
    %2776 = vmatpush1.bf16.msra.mxu0 %v2754
    %2777 = vmatprep.subr.bf16.mxu0 0
    %2778 = vmatpush1.bf16.msra.mxu0 %v2753
    %2779 = vmatprep.subr.bf16.mxu0 0
    %2780 = vmatpush1.bf16.msra.mxu0 %v2752
    %2781 = vmatprep.subr.bf16.mxu0 0
    %2782 = vmatpush1.bf16.msra.mxu0 %v2751
    %2783 = vmatprep.subr.bf16.mxu0 0
    %2784 = vmatpush2.bf16.msra.mxu0 0
    %2785 = vmatprep.subr.bf16.mxu0 0
    %2786 = vmatpush2.bf16.msra.mxu0 0
    %2787 = vmatprep.subr.bf16.mxu0 0
    %2788 = vmatpush2.bf16.msra.mxu0 0
    %2789 = vmatprep.subr.bf16.mxu0 0
    %2790 = vmatpush2.bf16.msra.mxu0 0
    %2791 = vmatprep.subr.bf16.mxu0 0
    %2792 = vmatpush2.bf16.msra.mxu0 0
    %2793 = vmatprep.subr.bf16.mxu0 0
    %2794 = vmatpush2.bf16.msra.mxu0 0
    %2795 = vmatprep.subr.bf16.mxu0 0
    %2796 = vmatpush2.bf16.msra.mxu0 0
    %2797 = vmatprep.subr.bf16.mxu0 0
    %2798 = vmatpush2.bf16.msra.mxu0 0
    %2799 = vmatprep.mubr.bf16.mxu0 0
    %2800 = vmatmul.mubr.bf16.gmra.mxu0 %v2717
    %v2801 = vpop.f32.mrf.mxu0
    %v2802 = vadd.f32 0.0, %v2801
    %v2803 = vpop.f32.mrf.mxu0
    %v2804 = vpop.f32.mrf.mxu0
    %v2805 = vpop.f32.mrf.mxu0
    %2806 = vdwg.mxu0
    %v2807 = vadd.f32 %v2698, %v2802
    %v2808 = vld [vmem:[#allocation6] sm:$0x1]
    %v2810 = vlaneseq
    %v2811 = vshrl.u32 %v2810, 7
    %v2812 = vsub.s32 0, %v2811
    %v2813 = vrot.slane %v2808, %v2812
    %v2815 = vadd.f32 %v2807, %v2813
    %v2816 = vpack.c.bf16 %v2815, %v2815
    %v2817 = vld [vmem:[%s7] sm:$0xf]
    %v2818 = vld [vmem:[%s7 + $0x4] sm:$0xf]
    %v2819 = vld [vmem:[%s7 + $0x8] sm:$0xf]
    %v2820 = vld [vmem:[%s7 + $0xc] sm:$0xf]
    %v2821 = vld [vmem:[#allocation7] sm:$0x1]
    %v2823 = vlaneseq
    %v2824 = vshrl.u32 %v2823, 7
    %v2825 = vsub.s32 0, %v2824
    %v2826 = vrot.slane %v2821, %v2825
    %v2832 = vunpack.c.l.b16 %v2817
    %v2833 = vunpack.c.l.b16 %v2818
    %v2834 = vunpack.c.l.b16 %v2819
    %v2835 = vunpack.c.l.b16 %v2820
    %v2836 = vpack.c.b16 %v2833, %v2832
    %v2837 = vpack.c.b16 %v2835, %v2834
    %vm2840 = vcmask 261120
    %v2842 = vsel %vm2840, %v2816, 0
    %2844 = vmatprep.subr.bf16.mxu0 0
    %2845 = vmatpush1.bf16.msra.mxu0 0
    %2846 = vmatprep.subr.bf16.mxu0 0
    %2847 = vmatpush1.bf16.msra.mxu0 0
    %2848 = vmatprep.subr.bf16.mxu0 0
    %2849 = vmatpush1.bf16.msra.mxu0 0
    %2850 = vmatprep.subr.bf16.mxu0 0
    %2851 = vmatpush1.bf16.msra.mxu0 0
    %2852 = vmatprep.subr.bf16.mxu0 0
    %2853 = vmatpush1.bf16.msra.mxu0 0
    %2854 = vmatprep.subr.bf16.mxu0 0
    %2855 = vmatpush1.bf16.msra.mxu0 0
    %2856 = vmatprep.subr.bf16.mxu0 0
    %2857 = vmatpush1.bf16.msra.mxu0 %v2837
    %2858 = vmatprep.subr.bf16.mxu0 0
    %2859 = vmatpush1.bf16.msra.mxu0 %v2836
    %2860 = vmatprep.subr.bf16.mxu0 0
    %2861 = vmatpush2.bf16.msra.mxu0 0
    %2862 = vmatprep.subr.bf16.mxu0 0
    %2863 = vmatpush2.bf16.msra.mxu0 0
    %2864 = vmatprep.subr.bf16.mxu0 0
    %2865 = vmatpush2.bf16.msra.mxu0 0
    %2866 = vmatprep.subr.bf16.mxu0 0
    %2867 = vmatpush2.bf16.msra.mxu0 0
    %2868 = vmatprep.subr.bf16.mxu0 0
    %2869 = vmatpush2.bf16.msra.mxu0 0
    %2870 = vmatprep.subr.bf16.mxu0 0
    %2871 = vmatpush2.bf16.msra.mxu0 0
    %2872 = vmatprep.subr.bf16.mxu0 0
    %2873 = vmatpush2.bf16.msra.mxu0 0
    %2874 = vmatprep.subr.bf16.mxu0 0
    %2875 = vmatpush2.bf16.msra.mxu0 0
    %2876 = vmatprep.mubr.bf16.mxu0 0
    %2877 = vmatmul.mubr.bf16.gmra.mxu0 %v2842
    %v2878 = vpop.f32.mrf.mxu0
    %v2879 = vadd.f32 %v2826, %v2878
    %v2880 = vpop.f32.mrf.mxu0
    %v2881 = vpop.f32.mrf.mxu0
    %v2882 = vpop.f32.mrf.mxu0
    %2883 = vdwg.mxu0
    %2884 = vmax.xlane.f32.xlu0 %v2879
    %v2885 = vpop.xlane.xlu0 %2884
    %v2886 = vsub.f32 %v2879, %v2885
    %v2887 = vmul.f32 %v2886, 1.442695
    %v2888 = vpow.pop %v2887
    %2889 = vadd.xlane.f32.xlu0 %v2888
    %v2890 = vpop.xlane.xlu0 %2889
    %v2891 = vlog2.pop %v2890
    %v2892 = vmul.f32 %v2891, 0.6931472
    %v2893 = vsub.f32 %v2886, %v2892
    %2894 = vst [vmem:[%s9] sm:$0xff] %v2893
    // Predicated region
    $region54: #{simple_cnn_forward.1} parent=1 // pred_check
      _
    $region55: #{simple_cnn_forward.1} parent=1 // pred_check_branch
      %2896 = sbr.rel (0) target = $region57
    $region56: #{simple_cnn_forward.1} parent=1 // pred_region
      _
    $region57: #{simple_cnn_forward.1} parent=1 // pred_fallthru
      _
    // Predicated region
    $region58: #{simple_cnn_forward.1} parent=1 // pred_check
      _
    $region59: #{simple_cnn_forward.1} parent=1 // pred_check_branch
      %2898 = sbr.rel (0) target = $region61
    $region60: #{simple_cnn_forward.1} parent=1 // pred_region
      _
    $region61: #{simple_cnn_forward.1} parent=1 // pred_fallthru
      _
    %2899 = vsyncpa [#allocation3], 1
    %2900 = vsyncpa [#allocation5], 1
    %2901 = vsyncpa [#allocation8], 1

</llo_original>
